<compile_context>
chip_gen: v7x
topology: tpu7x:2x2x1
jax: 0.10.0
libtpu: 0.0.40
codegen_flags: <defaults>
</compile_context>

<pallas_src>
import math

import jax
import jax.numpy as jnp
from jax.experimental import pallas as pl
from jax.experimental.pallas import tpu as pltpu


def _superlinear_kernel(x_ref, w_ref, b_ref, o_ref):
    # x_ref: (B, M, TN)  w_ref: (M, H, TN)  b_ref: (H, TN)  o_ref: (B, H, TN)
    m_dim = x_ref.shape[1]
    acc = jnp.zeros(o_ref.shape, jnp.float32)           # (B, H, TN), f32 accum
    # Static unroll over the (small) in_dims axis; each step is a lane-parallel
    # broadcast multiply-add on the VPU (N stays on lanes throughout).
    for m in range(m_dim):
        xm = x_ref[:, m:m + 1, :].astype(jnp.float32)   # (B, 1, TN)
        wm = w_ref[m:m + 1, :, :].astype(jnp.float32)   # (1, H, TN)
        acc = acc + xm * wm                              # (B, H, TN)
    acc = acc + b_ref[...].astype(jnp.float32)[None, :, :]
    o_ref[...] = acc.astype(o_ref.dtype)


def _pick_neuron_tile(N, bytes_per_lane, budget_bytes):
    """Largest lane-dense N tile that (double-buffered) fits the VMEM budget."""
    if N % 128 != 0:
        # Block last dim equal to the full axis is always legal.
        return N
    cap = (budget_bytes // (2 * bytes_per_lane)) // 128 * 128
    tn = min(N, 2048, max(cap, 128))
    while N % tn:
        tn -= 128
    # Keep >= 2 grid steps so the "parallel" axis can shard across the two
    # TensorCores on v7x instead of collapsing to a single step.
    if tn == N and N >= 256:
        half = (N // 2) // 128 * 128
        while half >= 128 and N % half:
            half -= 128
        if half >= 128:
            tn = half
    return tn


def superlinear_forward(x, w1, b1, *, neuron_tile=None, vmem_tile_budget=16 << 20):
    """Pallas implementation of SuperLinear.forward.

    Args:
      x:  (B, N, in_dims)        -- torch 'BDM'
      w1: (in_dims, out_dims, N) -- torch 'MHD' (kept in native layout)
      b1: (1, N, out_dims)
    Returns:
      (B, N) if out_dims == 1 else (B, N, out_dims)
    """
    B, N, M = x.shape
    Mw, H, Nw = w1.shape
    assert (Mw, Nw) == (M, N), "weight shape mismatch"
    assert b1.shape == (1, N, H), "bias shape mismatch"

    # Single activation relayout so N sits on the lane axis; weights stay put.
    x_t = jnp.transpose(x, (0, 2, 1))    # (B, M, N)
    b_t = jnp.transpose(b1[0], (1, 0))   # (H, N)  -- tiny

    itemsize = jnp.dtype(x.dtype).itemsize
    bytes_per_lane = itemsize * (B * M + M * H + B * H + H)
    if neuron_tile is None:
        TN = _pick_neuron_tile(N, bytes_per_lane, vmem_tile_budget)
    else:
        TN = neuron_tile
    assert N % TN == 0, "neuron count must be divisible by the neuron tile"

    grid = (N // TN,)
    flops = 2 * B * N * M * H
    bytes_accessed = itemsize * (x.size + w1.size + b1.size + B * H * N)

    out_nd = pl.pallas_call(
        _superlinear_kernel,
        out_shape=jax.ShapeDtypeStruct((B, H, N), x.dtype),
        grid=grid,
        in_specs=[
            pl.BlockSpec((B, M, TN), lambda n: (0, 0, n)),   # activations
            pl.BlockSpec((M, H, TN), lambda n: (0, 0, n)),   # weights (native)
            pl.BlockSpec((H, TN), lambda n: (0, n)),         # bias
        ],
        out_specs=pl.BlockSpec((B, H, TN), lambda n: (0, 0, n)),
        compiler_params=pltpu.CompilerParams(
            dimension_semantics=("parallel",),
            vmem_limit_bytes=40 << 20,
        ),
        cost_estimate=pl.CostEstimate(
            flops=flops,
            transcendentals=0,
            bytes_accessed=bytes_accessed,
        ),
    )(x_t, w1, b_t)

    if H == 1:
        # torch .squeeze(-1): (B, 1, N) -> (B, N); contiguous, so free.
        return out_nd.reshape(B, N)
    # Only the (small) output needs a relayout back to torch's (B, N, H).
    return jnp.transpose(out_nd, (0, 2, 1))


if __name__ == "__main__":
    def run_case(case_key, B, N, M, H):
        k_x, k_w, k_b = jax.random.split(case_key, 3)
        # Parameter init mirrors the torch __init__ bounds (bias made nonzero
        # here purely to exercise the bias path).
        bound = 1.0 / math.sqrt(M + H)
        w1 = jax.random.uniform(k_w, (M, H, N), jnp.float32, -bound, bound)
        b1 = 0.1 * jax.random.normal(k_b, (1, N, H), jnp.float32)
        x = jax.random.normal(k_x, (B, N, M), jnp.float32)

        out = jax.block_until_ready(superlinear_forward(x, w1, b1))

        # Pure-JAX reference (same math as the torch einsum).
        ref = jnp.einsum("BDM,MHD->BDH", x, w1) + b1
        if H == 1:
            ref = ref[..., 0]
        assert out.shape == ref.shape, (out.shape, ref.shape)
        assert jnp.allclose(out, ref, atol=1e-4, rtol=1e-5), "mismatch vs reference"

    key = jax.random.PRNGKey(0)
    k1, k2 = jax.random.split(key)
    # General NLM config (out_dims > 1) and the squeezed out_dims == 1 config.
    run_case(k1, B=2, N=512, M=32, H=4)
    run_case(k2, B=2, N=512, M=16, H=1)

    print("KERNEL_OK")
</pallas_src>

<mosaic_0001>
module attributes {stable_mosaic.version = 11 : i64} {
  func.func @_superlinear_kernel(%arg0: i32, %arg1: memref<2x32x256xf32, #tpu.memory_space<vmem>>, %arg2: memref<32x4x256xf32, #tpu.memory_space<vmem>>, %arg3: memref<4x256xf32, #tpu.memory_space<vmem>>, %arg4: memref<2x4x256xf32, #tpu.memory_space<vmem>>) attributes {dimension_semantics = [#tpu.dimension_semantics<parallel>], iteration_bounds = array<i64: 2>, scalar_prefetch = 0 : i64, scratch_operands = 0 : i64, tpu.core_type = #tpu.core_type<tc>, window_params = [{transform_indices = @transform_0, window_bounds = array<i64: 2, 32, 256>}, {transform_indices = @transform_1, window_bounds = array<i64: 32, 4, 256>}, {transform_indices = @transform_2, window_bounds = array<i64: 4, 256>}, {transform_indices = @transform_3, window_bounds = array<i64: 2, 4, 256>}]} {
    %cst = arith.constant 0.000000e+00 : f32
    %0 = vector.broadcast %cst : f32 to vector<2x4x256xf32>
    %c0 = arith.constant 0 : index
    %c0_0 = arith.constant 0 : index
    %c0_1 = arith.constant 0 : index
    %1 = vector.load %arg1[%c0, %c0_0, %c0_1] : memref<2x32x256xf32, #tpu.memory_space<vmem>>, vector<2x1x256xf32>
    %c0_2 = arith.constant 0 : index
    %c0_3 = arith.constant 0 : index
    %c0_4 = arith.constant 0 : index
    %2 = vector.load %arg2[%c0_2, %c0_3, %c0_4] : memref<32x4x256xf32, #tpu.memory_space<vmem>>, vector<1x4x256xf32>
    %3 = vector.broadcast %1 : vector<2x1x256xf32> to vector<2x4x256xf32>
    %4 = vector.broadcast %2 : vector<1x4x256xf32> to vector<2x4x256xf32>
    %5 = arith.mulf %3, %4 : vector<2x4x256xf32>
    %6 = arith.addf %0, %5 : vector<2x4x256xf32>
    %c0_5 = arith.constant 0 : index
    %c1 = arith.constant 1 : index
    %c0_6 = arith.constant 0 : index
    %7 = vector.load %arg1[%c0_5, %c1, %c0_6] : memref<2x32x256xf32, #tpu.memory_space<vmem>>, vector<2x1x256xf32>
    %c1_7 = arith.constant 1 : index
    %c0_8 = arith.constant 0 : index
    %c0_9 = arith.constant 0 : index
    %8 = vector.load %arg2[%c1_7, %c0_8, %c0_9] : memref<32x4x256xf32, #tpu.memory_space<vmem>>, vector<1x4x256xf32>
    %9 = vector.broadcast %7 : vector<2x1x256xf32> to vector<2x4x256xf32>
    %10 = vector.broadcast %8 : vector<1x4x256xf32> to vector<2x4x256xf32>
    %11 = arith.mulf %9, %10 : vector<2x4x256xf32>
    %12 = arith.addf %6, %11 : vector<2x4x256xf32>
    %c0_10 = arith.constant 0 : index
    %c2 = arith.constant 2 : index
    %c0_11 = arith.constant 0 : index
    %13 = vector.load %arg1[%c0_10, %c2, %c0_11] : memref<2x32x256xf32, #tpu.memory_space<vmem>>, vector<2x1x256xf32>
    %c2_12 = arith.constant 2 : index
    %c0_13 = arith.constant 0 : index
    %c0_14 = arith.constant 0 : index
    %14 = vector.load %arg2[%c2_12, %c0_13, %c0_14] : memref<32x4x256xf32, #tpu.memory_space<vmem>>, vector<1x4x256xf32>
    %15 = vector.broadcast %13 : vector<2x1x256xf32> to vector<2x4x256xf32>
    %16 = vector.broadcast %14 : vector<1x4x256xf32> to vector<2x4x256xf32>
    %17 = arith.mulf %15, %16 : vector<2x4x256xf32>
    %18 = arith.addf %12, %17 : vector<2x4x256xf32>
    %c0_15 = arith.constant 0 : index
    %c3 = arith.constant 3 : index
    %c0_16 = arith.constant 0 : index
    %19 = vector.load %arg1[%c0_15, %c3, %c0_16] : memref<2x32x256xf32, #tpu.memory_space<vmem>>, vector<2x1x256xf32>
    %c3_17 = arith.constant 3 : index
    %c0_18 = arith.constant 0 : index
    %c0_19 = arith.constant 0 : index
    %20 = vector.load %arg2[%c3_17, %c0_18, %c0_19] : memref<32x4x256xf32, #tpu.memory_space<vmem>>, vector<1x4x256xf32>
    %21 = vector.broadcast %19 : vector<2x1x256xf32> to vector<2x4x256xf32>
    %22 = vector.broadcast %20 : vector<1x4x256xf32> to vector<2x4x256xf32>
    %23 = arith.mulf %21, %22 : vector<2x4x256xf32>
    %24 = arith.addf %18, %23 : vector<2x4x256xf32>
    %c0_20 = arith.constant 0 : index
    %c4 = arith.constant 4 : index
    %c0_21 = arith.constant 0 : index
    %25 = vector.load %arg1[%c0_20, %c4, %c0_21] : memref<2x32x256xf32, #tpu.memory_space<vmem>>, vector<2x1x256xf32>
    %c4_22 = arith.constant 4 : index
    %c0_23 = arith.constant 0 : index
    %c0_24 = arith.constant 0 : index
    %26 = vector.load %arg2[%c4_22, %c0_23, %c0_24] : memref<32x4x256xf32, #tpu.memory_space<vmem>>, vector<1x4x256xf32>
    %27 = vector.broadcast %25 : vector<2x1x256xf32> to vector<2x4x256xf32>
    %28 = vector.broadcast %26 : vector<1x4x256xf32> to vector<2x4x256xf32>
    %29 = arith.mulf %27, %28 : vector<2x4x256xf32>
    %30 = arith.addf %24, %29 : vector<2x4x256xf32>
    %c0_25 = arith.constant 0 : index
    %c5 = arith.constant 5 : index
    %c0_26 = arith.constant 0 : index
    %31 = vector.load %arg1[%c0_25, %c5, %c0_26] : memref<2x32x256xf32, #tpu.memory_space<vmem>>, vector<2x1x256xf32>
    %c5_27 = arith.constant 5 : index
    %c0_28 = arith.constant 0 : index
    %c0_29 = arith.constant 0 : index
    %32 = vector.load %arg2[%c5_27, %c0_28, %c0_29] : memref<32x4x256xf32, #tpu.memory_space<vmem>>, vector<1x4x256xf32>
    %33 = vector.broadcast %31 : vector<2x1x256xf32> to vector<2x4x256xf32>
    %34 = vector.broadcast %32 : vector<1x4x256xf32> to vector<2x4x256xf32>
    %35 = arith.mulf %33, %34 : vector<2x4x256xf32>
    %36 = arith.addf %30, %35 : vector<2x4x256xf32>
    %c0_30 = arith.constant 0 : index
    %c6 = arith.constant 6 : index
    %c0_31 = arith.constant 0 : index
    %37 = vector.load %arg1[%c0_30, %c6, %c0_31] : memref<2x32x256xf32, #tpu.memory_space<vmem>>, vector<2x1x256xf32>
    %c6_32 = arith.constant 6 : index
    %c0_33 = arith.constant 0 : index
    %c0_34 = arith.constant 0 : index
    %38 = vector.load %arg2[%c6_32, %c0_33, %c0_34] : memref<32x4x256xf32, #tpu.memory_space<vmem>>, vector<1x4x256xf32>
    %39 = vector.broadcast %37 : vector<2x1x256xf32> to vector<2x4x256xf32>
    %40 = vector.broadcast %38 : vector<1x4x256xf32> to vector<2x4x256xf32>
    %41 = arith.mulf %39, %40 : vector<2x4x256xf32>
    %42 = arith.addf %36, %41 : vector<2x4x256xf32>
    %c0_35 = arith.constant 0 : index
    %c7 = arith.constant 7 : index
    %c0_36 = arith.constant 0 : index
    %43 = vector.load %arg1[%c0_35, %c7, %c0_36] : memref<2x32x256xf32, #tpu.memory_space<vmem>>, vector<2x1x256xf32>
    %c7_37 = arith.constant 7 : index
    %c0_38 = arith.constant 0 : index
    %c0_39 = arith.constant 0 : index
    %44 = vector.load %arg2[%c7_37, %c0_38, %c0_39] : memref<32x4x256xf32, #tpu.memory_space<vmem>>, vector<1x4x256xf32>
    %45 = vector.broadcast %43 : vector<2x1x256xf32> to vector<2x4x256xf32>
    %46 = vector.broadcast %44 : vector<1x4x256xf32> to vector<2x4x256xf32>
    %47 = arith.mulf %45, %46 : vector<2x4x256xf32>
    %48 = arith.addf %42, %47 : vector<2x4x256xf32>
    %c0_40 = arith.constant 0 : index
    %c8 = arith.constant 8 : index
    %c0_41 = arith.constant 0 : index
    %49 = vector.load %arg1[%c0_40, %c8, %c0_41] : memref<2x32x256xf32, #tpu.memory_space<vmem>>, vector<2x1x256xf32>
    %c8_42 = arith.constant 8 : index
    %c0_43 = arith.constant 0 : index
    %c0_44 = arith.constant 0 : index
    %50 = vector.load %arg2[%c8_42, %c0_43, %c0_44] : memref<32x4x256xf32, #tpu.memory_space<vmem>>, vector<1x4x256xf32>
    %51 = vector.broadcast %49 : vector<2x1x256xf32> to vector<2x4x256xf32>
    %52 = vector.broadcast %50 : vector<1x4x256xf32> to vector<2x4x256xf32>
    %53 = arith.mulf %51, %52 : vector<2x4x256xf32>
    %54 = arith.addf %48, %53 : vector<2x4x256xf32>
    %c0_45 = arith.constant 0 : index
    %c9 = arith.constant 9 : index
    %c0_46 = arith.constant 0 : index
    %55 = vector.load %arg1[%c0_45, %c9, %c0_46] : memref<2x32x256xf32, #tpu.memory_space<vmem>>, vector<2x1x256xf32>
    %c9_47 = arith.constant 9 : index
    %c0_48 = arith.constant 0 : index
    %c0_49 = arith.constant 0 : index
    %56 = vector.load %arg2[%c9_47, %c0_48, %c0_49] : memref<32x4x256xf32, #tpu.memory_space<vmem>>, vector<1x4x256xf32>
    %57 = vector.broadcast %55 : vector<2x1x256xf32> to vector<2x4x256xf32>
    %58 = vector.broadcast %56 : vector<1x4x256xf32> to vector<2x4x256xf32>
    %59 = arith.mulf %57, %58 : vector<2x4x256xf32>
    %60 = arith.addf %54, %59 : vector<2x4x256xf32>
    %c0_50 = arith.constant 0 : index
    %c10 = arith.constant 10 : index
    %c0_51 = arith.constant 0 : index
    %61 = vector.load %arg1[%c0_50, %c10, %c0_51] : memref<2x32x256xf32, #tpu.memory_space<vmem>>, vector<2x1x256xf32>
    %c10_52 = arith.constant 10 : index
    %c0_53 = arith.constant 0 : index
    %c0_54 = arith.constant 0 : index
    %62 = vector.load %arg2[%c10_52, %c0_53, %c0_54] : memref<32x4x256xf32, #tpu.memory_space<vmem>>, vector<1x4x256xf32>
    %63 = vector.broadcast %61 : vector<2x1x256xf32> to vector<2x4x256xf32>
    %64 = vector.broadcast %62 : vector<1x4x256xf32> to vector<2x4x256xf32>
    %65 = arith.mulf %63, %64 : vector<2x4x256xf32>
    %66 = arith.addf %60, %65 : vector<2x4x256xf32>
    %c0_55 = arith.constant 0 : index
    %c11 = arith.constant 11 : index
    %c0_56 = arith.constant 0 : index
    %67 = vector.load %arg1[%c0_55, %c11, %c0_56] : memref<2x32x256xf32, #tpu.memory_space<vmem>>, vector<2x1x256xf32>
    %c11_57 = arith.constant 11 : index
    %c0_58 = arith.constant 0 : index
    %c0_59 = arith.constant 0 : index
    %68 = vector.load %arg2[%c11_57, %c0_58, %c0_59] : memref<32x4x256xf32, #tpu.memory_space<vmem>>, vector<1x4x256xf32>
    %69 = vector.broadcast %67 : vector<2x1x256xf32> to vector<2x4x256xf32>
    %70 = vector.broadcast %68 : vector<1x4x256xf32> to vector<2x4x256xf32>
    %71 = arith.mulf %69, %70 : vector<2x4x256xf32>
    %72 = arith.addf %66, %71 : vector<2x4x256xf32>
    %c0_60 = arith.constant 0 : index
    %c12 = arith.constant 12 : index
    %c0_61 = arith.constant 0 : index
    %73 = vector.load %arg1[%c0_60, %c12, %c0_61] : memref<2x32x256xf32, #tpu.memory_space<vmem>>, vector<2x1x256xf32>
    %c12_62 = arith.constant 12 : index
    %c0_63 = arith.constant 0 : index
    %c0_64 = arith.constant 0 : index
    %74 = vector.load %arg2[%c12_62, %c0_63, %c0_64] : memref<32x4x256xf32, #tpu.memory_space<vmem>>, vector<1x4x256xf32>
    %75 = vector.broadcast %73 : vector<2x1x256xf32> to vector<2x4x256xf32>
    %76 = vector.broadcast %74 : vector<1x4x256xf32> to vector<2x4x256xf32>
    %77 = arith.mulf %75, %76 : vector<2x4x256xf32>
    %78 = arith.addf %72, %77 : vector<2x4x256xf32>
    %c0_65 = arith.constant 0 : index
    %c13 = arith.constant 13 : index
    %c0_66 = arith.constant 0 : index
    %79 = vector.load %arg1[%c0_65, %c13, %c0_66] : memref<2x32x256xf32, #tpu.memory_space<vmem>>, vector<2x1x256xf32>
    %c13_67 = arith.constant 13 : index
    %c0_68 = arith.constant 0 : index
    %c0_69 = arith.constant 0 : index
    %80 = vector.load %arg2[%c13_67, %c0_68, %c0_69] : memref<32x4x256xf32, #tpu.memory_space<vmem>>, vector<1x4x256xf32>
    %81 = vector.broadcast %79 : vector<2x1x256xf32> to vector<2x4x256xf32>
    %82 = vector.broadcast %80 : vector<1x4x256xf32> to vector<2x4x256xf32>
    %83 = arith.mulf %81, %82 : vector<2x4x256xf32>
    %84 = arith.addf %78, %83 : vector<2x4x256xf32>
    %c0_70 = arith.constant 0 : index
    %c14 = arith.constant 14 : index
    %c0_71 = arith.constant 0 : index
    %85 = vector.load %arg1[%c0_70, %c14, %c0_71] : memref<2x32x256xf32, #tpu.memory_space<vmem>>, vector<2x1x256xf32>
    %c14_72 = arith.constant 14 : index
    %c0_73 = arith.constant 0 : index
    %c0_74 = arith.constant 0 : index
    %86 = vector.load %arg2[%c14_72, %c0_73, %c0_74] : memref<32x4x256xf32, #tpu.memory_space<vmem>>, vector<1x4x256xf32>
    %87 = vector.broadcast %85 : vector<2x1x256xf32> to vector<2x4x256xf32>
    %88 = vector.broadcast %86 : vector<1x4x256xf32> to vector<2x4x256xf32>
    %89 = arith.mulf %87, %88 : vector<2x4x256xf32>
    %90 = arith.addf %84, %89 : vector<2x4x256xf32>
    %c0_75 = arith.constant 0 : index
    %c15 = arith.constant 15 : index
    %c0_76 = arith.constant 0 : index
    %91 = vector.load %arg1[%c0_75, %c15, %c0_76] : memref<2x32x256xf32, #tpu.memory_space<vmem>>, vector<2x1x256xf32>
    %c15_77 = arith.constant 15 : index
    %c0_78 = arith.constant 0 : index
    %c0_79 = arith.constant 0 : index
    %92 = vector.load %arg2[%c15_77, %c0_78, %c0_79] : memref<32x4x256xf32, #tpu.memory_space<vmem>>, vector<1x4x256xf32>
    %93 = vector.broadcast %91 : vector<2x1x256xf32> to vector<2x4x256xf32>
    %94 = vector.broadcast %92 : vector<1x4x256xf32> to vector<2x4x256xf32>
    %95 = arith.mulf %93, %94 : vector<2x4x256xf32>
    %96 = arith.addf %90, %95 : vector<2x4x256xf32>
    %c0_80 = arith.constant 0 : index
    %c16 = arith.constant 16 : index
    %c0_81 = arith.constant 0 : index
    %97 = vector.load %arg1[%c0_80, %c16, %c0_81] : memref<2x32x256xf32, #tpu.memory_space<vmem>>, vector<2x1x256xf32>
    %c16_82 = arith.constant 16 : index
    %c0_83 = arith.constant 0 : index
    %c0_84 = arith.constant 0 : index
    %98 = vector.load %arg2[%c16_82, %c0_83, %c0_84] : memref<32x4x256xf32, #tpu.memory_space<vmem>>, vector<1x4x256xf32>
    %99 = vector.broadcast %97 : vector<2x1x256xf32> to vector<2x4x256xf32>
    %100 = vector.broadcast %98 : vector<1x4x256xf32> to vector<2x4x256xf32>
    %101 = arith.mulf %99, %100 : vector<2x4x256xf32>
    %102 = arith.addf %96, %101 : vector<2x4x256xf32>
    %c0_85 = arith.constant 0 : index
    %c17 = arith.constant 17 : index
    %c0_86 = arith.constant 0 : index
    %103 = vector.load %arg1[%c0_85, %c17, %c0_86] : memref<2x32x256xf32, #tpu.memory_space<vmem>>, vector<2x1x256xf32>
    %c17_87 = arith.constant 17 : index
    %c0_88 = arith.constant 0 : index
    %c0_89 = arith.constant 0 : index
    %104 = vector.load %arg2[%c17_87, %c0_88, %c0_89] : memref<32x4x256xf32, #tpu.memory_space<vmem>>, vector<1x4x256xf32>
    %105 = vector.broadcast %103 : vector<2x1x256xf32> to vector<2x4x256xf32>
    %106 = vector.broadcast %104 : vector<1x4x256xf32> to vector<2x4x256xf32>
    %107 = arith.mulf %105, %106 : vector<2x4x256xf32>
    %108 = arith.addf %102, %107 : vector<2x4x256xf32>
    %c0_90 = arith.constant 0 : index
    %c18 = arith.constant 18 : index
    %c0_91 = arith.constant 0 : index
    %109 = vector.load %arg1[%c0_90, %c18, %c0_91] : memref<2x32x256xf32, #tpu.memory_space<vmem>>, vector<2x1x256xf32>
    %c18_92 = arith.constant 18 : index
    %c0_93 = arith.constant 0 : index
    %c0_94 = arith.constant 0 : index
    %110 = vector.load %arg2[%c18_92, %c0_93, %c0_94] : memref<32x4x256xf32, #tpu.memory_space<vmem>>, vector<1x4x256xf32>
    %111 = vector.broadcast %109 : vector<2x1x256xf32> to vector<2x4x256xf32>
    %112 = vector.broadcast %110 : vector<1x4x256xf32> to vector<2x4x256xf32>
    %113 = arith.mulf %111, %112 : vector<2x4x256xf32>
    %114 = arith.addf %108, %113 : vector<2x4x256xf32>
    %c0_95 = arith.constant 0 : index
    %c19 = arith.constant 19 : index
    %c0_96 = arith.constant 0 : index
    %115 = vector.load %arg1[%c0_95, %c19, %c0_96] : memref<2x32x256xf32, #tpu.memory_space<vmem>>, vector<2x1x256xf32>
    %c19_97 = arith.constant 19 : index
    %c0_98 = arith.constant 0 : index
    %c0_99 = arith.constant 0 : index
    %116 = vector.load %arg2[%c19_97, %c0_98, %c0_99] : memref<32x4x256xf32, #tpu.memory_space<vmem>>, vector<1x4x256xf32>
    %117 = vector.broadcast %115 : vector<2x1x256xf32> to vector<2x4x256xf32>
    %118 = vector.broadcast %116 : vector<1x4x256xf32> to vector<2x4x256xf32>
    %119 = arith.mulf %117, %118 : vector<2x4x256xf32>
    %120 = arith.addf %114, %119 : vector<2x4x256xf32>
    %c0_100 = arith.constant 0 : index
    %c20 = arith.constant 20 : index
    %c0_101 = arith.constant 0 : index
    %121 = vector.load %arg1[%c0_100, %c20, %c0_101] : memref<2x32x256xf32, #tpu.memory_space<vmem>>, vector<2x1x256xf32>
    %c20_102 = arith.constant 20 : index
    %c0_103 = arith.constant 0 : index
    %c0_104 = arith.constant 0 : index
    %122 = vector.load %arg2[%c20_102, %c0_103, %c0_104] : memref<32x4x256xf32, #tpu.memory_space<vmem>>, vector<1x4x256xf32>
    %123 = vector.broadcast %121 : vector<2x1x256xf32> to vector<2x4x256xf32>
    %124 = vector.broadcast %122 : vector<1x4x256xf32> to vector<2x4x256xf32>
    %125 = arith.mulf %123, %124 : vector<2x4x256xf32>
    %126 = arith.addf %120, %125 : vector<2x4x256xf32>
    %c0_105 = arith.constant 0 : index
    %c21 = arith.constant 21 : index
    %c0_106 = arith.constant 0 : index
    %127 = vector.load %arg1[%c0_105, %c21, %c0_106] : memref<2x32x256xf32, #tpu.memory_space<vmem>>, vector<2x1x256xf32>
    %c21_107 = arith.constant 21 : index
    %c0_108 = arith.constant 0 : index
    %c0_109 = arith.constant 0 : index
    %128 = vector.load %arg2[%c21_107, %c0_108, %c0_109] : memref<32x4x256xf32, #tpu.memory_space<vmem>>, vector<1x4x256xf32>
    %129 = vector.broadcast %127 : vector<2x1x256xf32> to vector<2x4x256xf32>
    %130 = vector.broadcast %128 : vector<1x4x256xf32> to vector<2x4x256xf32>
    %131 = arith.mulf %129, %130 : vector<2x4x256xf32>
    %132 = arith.addf %126, %131 : vector<2x4x256xf32>
    %c0_110 = arith.constant 0 : index
    %c22 = arith.constant 22 : index
    %c0_111 = arith.constant 0 : index
    %133 = vector.load %arg1[%c0_110, %c22, %c0_111] : memref<2x32x256xf32, #tpu.memory_space<vmem>>, vector<2x1x256xf32>
    %c22_112 = arith.constant 22 : index
    %c0_113 = arith.constant 0 : index
    %c0_114 = arith.constant 0 : index
    %134 = vector.load %arg2[%c22_112, %c0_113, %c0_114] : memref<32x4x256xf32, #tpu.memory_space<vmem>>, vector<1x4x256xf32>
    %135 = vector.broadcast %133 : vector<2x1x256xf32> to vector<2x4x256xf32>
    %136 = vector.broadcast %134 : vector<1x4x256xf32> to vector<2x4x256xf32>
    %137 = arith.mulf %135, %136 : vector<2x4x256xf32>
    %138 = arith.addf %132, %137 : vector<2x4x256xf32>
    %c0_115 = arith.constant 0 : index
    %c23 = arith.constant 23 : index
    %c0_116 = arith.constant 0 : index
    %139 = vector.load %arg1[%c0_115, %c23, %c0_116] : memref<2x32x256xf32, #tpu.memory_space<vmem>>, vector<2x1x256xf32>
    %c23_117 = arith.constant 23 : index
    %c0_118 = arith.constant 0 : index
    %c0_119 = arith.constant 0 : index
    %140 = vector.load %arg2[%c23_117, %c0_118, %c0_119] : memref<32x4x256xf32, #tpu.memory_space<vmem>>, vector<1x4x256xf32>
    %141 = vector.broadcast %139 : vector<2x1x256xf32> to vector<2x4x256xf32>
    %142 = vector.broadcast %140 : vector<1x4x256xf32> to vector<2x4x256xf32>
    %143 = arith.mulf %141, %142 : vector<2x4x256xf32>
    %144 = arith.addf %138, %143 : vector<2x4x256xf32>
    %c0_120 = arith.constant 0 : index
    %c24 = arith.constant 24 : index
    %c0_121 = arith.constant 0 : index
    %145 = vector.load %arg1[%c0_120, %c24, %c0_121] : memref<2x32x256xf32, #tpu.memory_space<vmem>>, vector<2x1x256xf32>
    %c24_122 = arith.constant 24 : index
    %c0_123 = arith.constant 0 : index
    %c0_124 = arith.constant 0 : index
    %146 = vector.load %arg2[%c24_122, %c0_123, %c0_124] : memref<32x4x256xf32, #tpu.memory_space<vmem>>, vector<1x4x256xf32>
    %147 = vector.broadcast %145 : vector<2x1x256xf32> to vector<2x4x256xf32>
    %148 = vector.broadcast %146 : vector<1x4x256xf32> to vector<2x4x256xf32>
    %149 = arith.mulf %147, %148 : vector<2x4x256xf32>
    %150 = arith.addf %144, %149 : vector<2x4x256xf32>
    %c0_125 = arith.constant 0 : index
    %c25 = arith.constant 25 : index
    %c0_126 = arith.constant 0 : index
    %151 = vector.load %arg1[%c0_125, %c25, %c0_126] : memref<2x32x256xf32, #tpu.memory_space<vmem>>, vector<2x1x256xf32>
    %c25_127 = arith.constant 25 : index
    %c0_128 = arith.constant 0 : index
    %c0_129 = arith.constant 0 : index
    %152 = vector.load %arg2[%c25_127, %c0_128, %c0_129] : memref<32x4x256xf32, #tpu.memory_space<vmem>>, vector<1x4x256xf32>
    %153 = vector.broadcast %151 : vector<2x1x256xf32> to vector<2x4x256xf32>
    %154 = vector.broadcast %152 : vector<1x4x256xf32> to vector<2x4x256xf32>
    %155 = arith.mulf %153, %154 : vector<2x4x256xf32>
    %156 = arith.addf %150, %155 : vector<2x4x256xf32>
    %c0_130 = arith.constant 0 : index
    %c26 = arith.constant 26 : index
    %c0_131 = arith.constant 0 : index
    %157 = vector.load %arg1[%c0_130, %c26, %c0_131] : memref<2x32x256xf32, #tpu.memory_space<vmem>>, vector<2x1x256xf32>
    %c26_132 = arith.constant 26 : index
    %c0_133 = arith.constant 0 : index
    %c0_134 = arith.constant 0 : index
    %158 = vector.load %arg2[%c26_132, %c0_133, %c0_134] : memref<32x4x256xf32, #tpu.memory_space<vmem>>, vector<1x4x256xf32>
    %159 = vector.broadcast %157 : vector<2x1x256xf32> to vector<2x4x256xf32>
    %160 = vector.broadcast %158 : vector<1x4x256xf32> to vector<2x4x256xf32>
    %161 = arith.mulf %159, %160 : vector<2x4x256xf32>
    %162 = arith.addf %156, %161 : vector<2x4x256xf32>
    %c0_135 = arith.constant 0 : index
    %c27 = arith.constant 27 : index
    %c0_136 = arith.constant 0 : index
    %163 = vector.load %arg1[%c0_135, %c27, %c0_136] : memref<2x32x256xf32, #tpu.memory_space<vmem>>, vector<2x1x256xf32>
    %c27_137 = arith.constant 27 : index
    %c0_138 = arith.constant 0 : index
    %c0_139 = arith.constant 0 : index
    %164 = vector.load %arg2[%c27_137, %c0_138, %c0_139] : memref<32x4x256xf32, #tpu.memory_space<vmem>>, vector<1x4x256xf32>
    %165 = vector.broadcast %163 : vector<2x1x256xf32> to vector<2x4x256xf32>
    %166 = vector.broadcast %164 : vector<1x4x256xf32> to vector<2x4x256xf32>
    %167 = arith.mulf %165, %166 : vector<2x4x256xf32>
    %168 = arith.addf %162, %167 : vector<2x4x256xf32>
    %c0_140 = arith.constant 0 : index
    %c28 = arith.constant 28 : index
    %c0_141 = arith.constant 0 : index
    %169 = vector.load %arg1[%c0_140, %c28, %c0_141] : memref<2x32x256xf32, #tpu.memory_space<vmem>>, vector<2x1x256xf32>
    %c28_142 = arith.constant 28 : index
    %c0_143 = arith.constant 0 : index
    %c0_144 = arith.constant 0 : index
    %170 = vector.load %arg2[%c28_142, %c0_143, %c0_144] : memref<32x4x256xf32, #tpu.memory_space<vmem>>, vector<1x4x256xf32>
    %171 = vector.broadcast %169 : vector<2x1x256xf32> to vector<2x4x256xf32>
    %172 = vector.broadcast %170 : vector<1x4x256xf32> to vector<2x4x256xf32>
    %173 = arith.mulf %171, %172 : vector<2x4x256xf32>
    %174 = arith.addf %168, %173 : vector<2x4x256xf32>
    %c0_145 = arith.constant 0 : index
    %c29 = arith.constant 29 : index
    %c0_146 = arith.constant 0 : index
    %175 = vector.load %arg1[%c0_145, %c29, %c0_146] : memref<2x32x256xf32, #tpu.memory_space<vmem>>, vector<2x1x256xf32>
    %c29_147 = arith.constant 29 : index
    %c0_148 = arith.constant 0 : index
    %c0_149 = arith.constant 0 : index
    %176 = vector.load %arg2[%c29_147, %c0_148, %c0_149] : memref<32x4x256xf32, #tpu.memory_space<vmem>>, vector<1x4x256xf32>
    %177 = vector.broadcast %175 : vector<2x1x256xf32> to vector<2x4x256xf32>
    %178 = vector.broadcast %176 : vector<1x4x256xf32> to vector<2x4x256xf32>
    %179 = arith.mulf %177, %178 : vector<2x4x256xf32>
    %180 = arith.addf %174, %179 : vector<2x4x256xf32>
    %c0_150 = arith.constant 0 : index
    %c30 = arith.constant 30 : index
    %c0_151 = arith.constant 0 : index
    %181 = vector.load %arg1[%c0_150, %c30, %c0_151] : memref<2x32x256xf32, #tpu.memory_space<vmem>>, vector<2x1x256xf32>
    %c30_152 = arith.constant 30 : index
    %c0_153 = arith.constant 0 : index
    %c0_154 = arith.constant 0 : index
    %182 = vector.load %arg2[%c30_152, %c0_153, %c0_154] : memref<32x4x256xf32, #tpu.memory_space<vmem>>, vector<1x4x256xf32>
    %183 = vector.broadcast %181 : vector<2x1x256xf32> to vector<2x4x256xf32>
    %184 = vector.broadcast %182 : vector<1x4x256xf32> to vector<2x4x256xf32>
    %185 = arith.mulf %183, %184 : vector<2x4x256xf32>
    %186 = arith.addf %180, %185 : vector<2x4x256xf32>
    %c0_155 = arith.constant 0 : index
    %c31 = arith.constant 31 : index
    %c0_156 = arith.constant 0 : index
    %187 = vector.load %arg1[%c0_155, %c31, %c0_156] : memref<2x32x256xf32, #tpu.memory_space<vmem>>, vector<2x1x256xf32>
    %c31_157 = arith.constant 31 : index
    %c0_158 = arith.constant 0 : index
    %c0_159 = arith.constant 0 : index
    %188 = vector.load %arg2[%c31_157, %c0_158, %c0_159] : memref<32x4x256xf32, #tpu.memory_space<vmem>>, vector<1x4x256xf32>
    %189 = vector.broadcast %187 : vector<2x1x256xf32> to vector<2x4x256xf32>
    %190 = vector.broadcast %188 : vector<1x4x256xf32> to vector<2x4x256xf32>
    %191 = arith.mulf %189, %190 : vector<2x4x256xf32>
    %192 = arith.addf %186, %191 : vector<2x4x256xf32>
    %c0_160 = arith.constant 0 : index
    %c0_161 = arith.constant 0 : index
    %193 = vector.load %arg3[%c0_160, %c0_161] : memref<4x256xf32, #tpu.memory_space<vmem>>, vector<4x256xf32>
    %194 = vector.shape_cast %193 : vector<4x256xf32> to vector<1x4x256xf32>
    %195 = vector.broadcast %194 : vector<1x4x256xf32> to vector<2x4x256xf32>
    %196 = arith.addf %192, %195 : vector<2x4x256xf32>
    %c0_162 = arith.constant 0 : index
    %c0_163 = arith.constant 0 : index
    %c0_164 = arith.constant 0 : index
    %197 = vector.load %arg4[%c0_162, %c0_163, %c0_164] : memref<2x4x256xf32, #tpu.memory_space<vmem>>, vector<2x4x256xf32>
    tpu.vector_store %arg4[%c0_162, %c0_163, %c0_164], %196 {strides = array<i32>} : memref<2x4x256xf32, #tpu.memory_space<vmem>>, vector<2x4x256xf32>,
    return
  }
  func.func @transform_0(%arg0: i32) -> (i32, i32, i32) {
    %c0_i32 = arith.constant 0 : i32
    %c0_i32_0 = arith.constant 0 : i32
    %c0_i32_1 = arith.constant 0 : i32
    return %c0_i32, %c0_i32_0, %arg0 : i32, i32, i32
  }
  func.func @transform_1(%arg0: i32) -> (i32, i32, i32) {
    %c0_i32 = arith.constant 0 : i32
    %c0_i32_0 = arith.constant 0 : i32
    %c0_i32_1 = arith.constant 0 : i32
    return %c0_i32, %c0_i32_0, %arg0 : i32, i32, i32
  }
  func.func @transform_2(%arg0: i32) -> (i32, i32) {
    %c0_i32 = arith.constant 0 : i32
    %c0_i32_0 = arith.constant 0 : i32
    return %c0_i32, %arg0 : i32, i32
  }
  func.func @transform_3(%arg0: i32) -> (i32, i32, i32) {
    %c0_i32 = arith.constant 0 : i32
    %c0_i32_0 = arith.constant 0 : i32
    %c0_i32_1 = arith.constant 0 : i32
    return %c0_i32, %c0_i32_0, %arg0 : i32, i32, i32
  }
}

</mosaic_0001>

<llo_original>
// kernel: tpu_custom_call.1
$region0: #{tpu_custom_call.1}
  #allocation0 [shape = 'u32[]', space=smem, size = 0x4, offset = 0x4, fixed_abs, tag = 'smem constant byte address 0x4 - core index']
  #allocation1 [shape = 'u32[144,128]{1,0:T(1,128)}', space=vmem, size = 0x12000, scoped, tag = 'internal scratch']
  %s0 = inlined_call_operand.hbm [shape: f32[2,32,512], index: 0, kind: input, shape index: {}]
  %s1 = inlined_call_operand.hbm [shape: f32[32,4,512], index: 1, kind: input, shape index: {}]
  %s2 = inlined_call_operand.hbm [shape: f32[4,512], index: 2, kind: input, shape index: {}]
  %s3 = inlined_call_operand.hbm [shape: f32[2,4,512], index: 3, kind: output, shape index: {}]
  %s4 = sld [smem:[#allocation0]]
  $region57: #{tpu_custom_call.1} parent=0
    _
  %s6 = ssub.s32 1, %s4
  %s7 = scalar_select 0, %s6, %s4
  $region1: #{tpu_custom_call.1} parent=0
    #allocation2 [shape = 'u8[131072]{0}', space=vmem, size = 0x20000, scoped, tag = 'input window, operand 0']
    #allocation3 [shape = 's32[2]{0}', space=sflag, size = 0x8, scoped, tag = 'scoped memory for tpu_custom_call.1']
    #allocation4 [shape = 's32[2]{0}', space=sflag, size = 0x8, scoped, tag = 'scoped memory for tpu_custom_call.1']
    #allocation5 [shape = 'u8[262144]{0}', space=vmem, size = 0x40000, scoped, tag = 'input window, operand 1']
    #allocation6 [shape = 's32[2]{0}', space=sflag, size = 0x8, scoped, tag = 'scoped memory for tpu_custom_call.1']
    #allocation7 [shape = 'u8[8192]{0}', space=vmem, size = 0x2000, scoped, tag = 'input window, operand 2']
    #allocation8 [shape = 'u8[16384]{0}', space=vmem, size = 0x4000, scoped, tag = 'output window, operand 0']
    %8 = vsyncpa [#allocation3], 0
    %s9 = scalar_lea.sflag [#allocation3], 1
    %10 = vsyncpa %s9, 0
    %11 = vsyncpa [#allocation6], 0
    %s12 = scalar_lea.sflag [#allocation6], 1
    %13 = vsyncpa %s12, 0
    %14 = vsyncpa [#allocation4], 0
    %s15 = scalar_lea.sflag [#allocation4], 1
    %16 = vsyncpa %s15, 0
    loop: start=0, step=1, limit=4
    $region2: #{tpu_custom_call.1} parent=1 // loop_pre_header
      _
    $region3: #{tpu_custom_call.1} parent=1 // loop_header
      %s18 = sphi 0, %s22
      %p19 = scmp.ge.s32.totalorder %s18, 4
      %s28 = sphi 0, %s30
      %s31 = sphi 0, %s28
      %s32 = sphi 0, %s31
      %s48 = sphi 0, %s32
      %s54 = sphi 0, %s56
      %s57 = sphi 0, %s54
      %s58 = sphi 0, %s57
      %s74 = sphi 0, %s58
      %s80 = sphi 0, %s82
      %s83 = sphi 0, %s80
      %s84 = sphi 0, %s83
      %s100 = sphi 0, %s84
      %s106 = sphi 0, %s108
      %s109 = sphi 0, %s106
      %s110 = sphi 0, %s109
      %s126 = sphi 0, %s110
    $region4: #{tpu_custom_call.1} parent=1 // loop_header_branch
      %21 = sbr.rel (%p19) target = $region8
    $region5: #{tpu_custom_call.1} parent=1 // loop_body
      %s23 = ssub.s32 %s18, 1
      %s24 = ssub.s32 %s18, 2
      %s25 = sadd.s32 %s18, 1
      %s26 = ssub.s32 %s18, %s25
      %p27 = scmp.eq.s32.totalorder %s26, 0
      %s29 = sadd.s32 %s28, 1
      %s30 = scalar_select %p27, %s28, %s29
      %p33 = pneg %p27
      %p34 = scmp.eq.s32.totalorder %s18, 1
      %p35 = por %p33, %p34
      %p36 = scmp.ne.s32.totalorder %s28, %s31
      %p37 = scmp.eq.s32.totalorder %s18, 0
      %p38 = por %p36, %p37
      %p39 = scmp.ne.s32.totalorder %s28, %s31
      %p40 = scmp.eq.s32.totalorder %s23, 1
      %p41 = por %p39, %p40
      %p42 = scmp.ne.s32.totalorder %s31, %s32
      %p43 = scmp.eq.s32.totalorder %s23, 0
      %p44 = por %p42, %p43
      %p45 = scmp.ne.s32.totalorder %s31, %s32
      %p46 = scmp.eq.s32.totalorder %s24, 1
      %p47 = por %p45, %p46
      %p49 = scmp.ne.s32.totalorder %s32, %s48
      %p50 = scmp.eq.s32.totalorder %s24, 0
      %p51 = por %p49, %p50
      %s52 = ssub.s32 %s18, %s25
      %p53 = scmp.eq.s32.totalorder %s52, 0
      %s55 = sadd.s32 %s54, 1
      %s56 = scalar_select %p53, %s54, %s55
      %p59 = pneg %p53
      %p60 = scmp.eq.s32.totalorder %s18, 1
      %p61 = por %p59, %p60
      %p62 = scmp.ne.s32.totalorder %s54, %s57
      %p63 = scmp.eq.s32.totalorder %s18, 0
      %p64 = por %p62, %p63
      %p65 = scmp.ne.s32.totalorder %s54, %s57
      %p66 = scmp.eq.s32.totalorder %s23, 1
      %p67 = por %p65, %p66
      %p68 = scmp.ne.s32.totalorder %s57, %s58
      %p69 = scmp.eq.s32.totalorder %s23, 0
      %p70 = por %p68, %p69
      %p71 = scmp.ne.s32.totalorder %s57, %s58
      %p72 = scmp.eq.s32.totalorder %s24, 1
      %p73 = por %p71, %p72
      %p75 = scmp.ne.s32.totalorder %s58, %s74
      %p76 = scmp.eq.s32.totalorder %s24, 0
      %p77 = por %p75, %p76
      %s78 = ssub.s32 %s18, %s25
      %p79 = scmp.eq.s32.totalorder %s78, 0
      %s81 = sadd.s32 %s80, 1
      %s82 = scalar_select %p79, %s80, %s81
      %p85 = pneg %p79
      %p86 = scmp.eq.s32.totalorder %s18, 1
      %p87 = por %p85, %p86
      %p88 = scmp.ne.s32.totalorder %s80, %s83
      %p89 = scmp.eq.s32.totalorder %s18, 0
      %p90 = por %p88, %p89
      %p91 = scmp.ne.s32.totalorder %s80, %s83
      %p92 = scmp.eq.s32.totalorder %s23, 1
      %p93 = por %p91, %p92
      %p94 = scmp.ne.s32.totalorder %s83, %s84
      %p95 = scmp.eq.s32.totalorder %s23, 0
      %p96 = por %p94, %p95
      %p97 = scmp.ne.s32.totalorder %s83, %s84
      %p98 = scmp.eq.s32.totalorder %s24, 1
      %p99 = por %p97, %p98
      %p101 = scmp.ne.s32.totalorder %s84, %s100
      %p102 = scmp.eq.s32.totalorder %s24, 0
      %p103 = por %p101, %p102
      %s104 = ssub.s32 %s18, %s25
      %p105 = scmp.eq.s32.totalorder %s104, 0
      %s107 = sadd.s32 %s106, 1
      %s108 = scalar_select %p105, %s106, %s107
      %p111 = pneg %p105
      %p112 = scmp.eq.s32.totalorder %s18, 1
      %p113 = por %p111, %p112
      %p114 = scmp.ne.s32.totalorder %s106, %s109
      %p115 = scmp.eq.s32.totalorder %s18, 0
      %p116 = por %p114, %p115
      %p117 = scmp.ne.s32.totalorder %s106, %s109
      %p118 = scmp.eq.s32.totalorder %s23, 1
      %p119 = por %p117, %p118
      %p120 = scmp.ne.s32.totalorder %s109, %s110
      %p121 = scmp.eq.s32.totalorder %s23, 0
      %p122 = por %p120, %p121
      %p123 = scmp.ne.s32.totalorder %s109, %s110
      %p124 = scmp.eq.s32.totalorder %s24, 1
      %p125 = por %p123, %p124
      %p127 = scmp.ne.s32.totalorder %s110, %s126
      %p128 = scmp.eq.s32.totalorder %s24, 0
      %p129 = por %p127, %p128
      %p130 = scmp.le.s32.totalorder 1, %s18
      %p131 = scmp.lt.s32.totalorder %s18, 3
      %p132 = pnand %p130, %p131
      %p133 = pneg %p132
      // Predicated region
      $region9: #{tpu_custom_call.1} parent=5 // pred_check
        _
      $region10: #{tpu_custom_call.1} parent=5 // pred_check_branch
        %135 = sbr.rel (%p132) target = $region12
      $region11: #{tpu_custom_call.1} parent=5 // pred_region
        %s136 = ssub.s32 %s18, 1
      $region12: #{tpu_custom_call.1} parent=5 // pred_fallthru
        _
      %p137 = scmp.lt.s32.totalorder %s18, 2
      // Predicated region
      $region13: #{tpu_custom_call.1} parent=5 // pred_check
        %p138 = pneg %p137
      $region14: #{tpu_custom_call.1} parent=5 // pred_check_branch
        %140 = sbr.rel (%p138) target = $region16
      $region15: #{tpu_custom_call.1} parent=5 // pred_region
        // Predicated region
        $region17: #{tpu_custom_call.1} parent=15 // pred_check
          %p141 = pneg %p38
        $region18: #{tpu_custom_call.1} parent=15 // pred_check_branch
          %143 = sbr.rel (%p141) target = $region20
        $region19: #{tpu_custom_call.1} parent=15 // pred_region
          %s144 = sand.u32 %s28, 1
          %s145 = scalar_lea.sflag [#allocation3], %s144
          %s146 = sand.u32 %s28, 1
          %s147 = smul.addr %s146, 128
          %s148 = scalar_lea.vmem [#allocation2], %s147
          %s149 = smul.u32 2, %s18
          %s151 = ssub.s32 2048, 2048
          %152 = vsyncadd %s145, %s151
          %s153 = smul.addr %s149, 128
          %s154 = scalar_lea.hbm %s0, %s153
          %s155 = sshll.u32 %s148, 4
          %s156 = int_to_ptr.vmem [resolvable:$true] %s155
          %161 = dma.hbm_to_vmem [thread:$0]  %s154, 2048, %s156, %s145, 512, 256, 16
        $region20: #{tpu_custom_call.1} parent=15 // pred_fallthru
          _
        // Predicated region
        $region21: #{tpu_custom_call.1} parent=15 // pred_check
          %p162 = pneg %p64
        $region22: #{tpu_custom_call.1} parent=15 // pred_check_branch
          %164 = sbr.rel (%p162) target = $region24
        $region23: #{tpu_custom_call.1} parent=15 // pred_region
          %s165 = sand.u32 %s18, 1
          %s166 = scalar_lea.sflag [#allocation6], %s165
          %s167 = sand.u32 %s54, 1
          %s168 = smul.addr %s167, 256
          %s169 = scalar_lea.vmem [#allocation5], %s168
          %s170 = smul.u32 2, %s18
          %s172 = ssub.s32 4096, 4096
          %173 = vsyncadd %s166, %s172
          %s174 = smul.addr %s170, 64
          %s175 = scalar_lea.hbm %s1, %s174
          %s176 = sshll.u32 %s169, 4
          %s177 = int_to_ptr.vmem [resolvable:$true] %s176
          %182 = dma.hbm_to_vmem [thread:$0]  %s175, 4096, %s177, %s166, 256, 128, 8
        $region24: #{tpu_custom_call.1} parent=15 // pred_fallthru
          _
        // Predicated region
        $region25: #{tpu_custom_call.1} parent=15 // pred_check
          %p183 = pneg %p90
        $region26: #{tpu_custom_call.1} parent=15 // pred_check_branch
          %185 = sbr.rel (%p183) target = $region28
        $region27: #{tpu_custom_call.1} parent=15 // pred_region
          %s186 = sand.u32 %s18, 1
          %s187 = scalar_lea.sflag [#allocation6], %s186
          %s188 = sand.u32 %s80, 1
          %s189 = smul.addr %s188, 8
          %s190 = scalar_lea.vmem [#allocation7], %s189
          %s191 = smul.u32 2, %s18
          %s193 = ssub.s32 128, 128
          %194 = vsyncadd %s187, %s193
          %s195 = smul.addr %s191, 64
          %s196 = scalar_lea.hbm %s2, %s195
          %s198 = sshll.u32 %s190, 4
          %s199 = int_to_ptr.vmem [resolvable:$true] %s198
          %201 = dma.hbm_to_vmem [thread:$0]  %s196, 128, %s199, %s187
        $region28: #{tpu_custom_call.1} parent=15 // pred_fallthru
          _
      $region16: #{tpu_custom_call.1} parent=5 // pred_fallthru
        _
      %p202 = scmp.le.s32.totalorder 1, %s18
      %p203 = scmp.lt.s32.totalorder %s18, 3
      %p204 = pnand %p202, %p203
      %p205 = pneg %p204
      // Predicated region
      $region29: #{tpu_custom_call.1} parent=5 // pred_check
        _
      $region30: #{tpu_custom_call.1} parent=5 // pred_check_branch
        %207 = sbr.rel (%p204) target = $region32
      $region31: #{tpu_custom_call.1} parent=5 // pred_region
        %s208 = ssub.s32 %s18, 1
        %s209 = sand.u32 %s31, 1
        %s210 = scalar_lea.sflag [#allocation3], %s209
        %s211 = sand.u32 %s31, 1
        %s212 = smul.addr %s211, 128
        %s213 = scalar_lea.vmem [#allocation2], %s212
        // Predicated region
        $region33: #{tpu_custom_call.1} parent=31 // pred_check
          %p214 = pneg %p44
        $region34: #{tpu_custom_call.1} parent=31 // pred_check_branch
          %216 = sbr.rel (%p214) target = $region36
        $region35: #{tpu_custom_call.1} parent=31 // pred_region
          %217 = dma.done %s210, 2048
        $region36: #{tpu_custom_call.1} parent=31 // pred_fallthru
          _
        %s218 = sand.u32 %s23, 1
        %s219 = scalar_lea.sflag [#allocation6], %s218
        %s220 = sand.u32 %s57, 1
        %s221 = smul.addr %s220, 256
        %s222 = scalar_lea.vmem [#allocation5], %s221
        // Predicated region
        $region37: #{tpu_custom_call.1} parent=31 // pred_check
          %p223 = pneg %p70
        $region38: #{tpu_custom_call.1} parent=31 // pred_check_branch
          %225 = sbr.rel (%p223) target = $region40
        $region39: #{tpu_custom_call.1} parent=31 // pred_region
          %226 = dma.done %s219, 4096
        $region40: #{tpu_custom_call.1} parent=31 // pred_fallthru
          _
        %s227 = sand.u32 %s23, 1
        %s228 = scalar_lea.sflag [#allocation6], %s227
        %s229 = sand.u32 %s83, 1
        %s230 = smul.addr %s229, 8
        %s231 = scalar_lea.vmem [#allocation7], %s230
        // Predicated region
        $region41: #{tpu_custom_call.1} parent=31 // pred_check
          %p232 = pneg %p96
        $region42: #{tpu_custom_call.1} parent=31 // pred_check_branch
          %234 = sbr.rel (%p232) target = $region44
        $region43: #{tpu_custom_call.1} parent=31 // pred_region
          %235 = dma.done %s228, 128
        $region44: #{tpu_custom_call.1} parent=31 // pred_fallthru
          _
        %s236 = sand.u32 %s31, 1
        %s237 = scalar_lea.sflag [#allocation3], %s236
        %s238 = sand.u32 %s31, 1
        %s239 = smul.addr %s238, 128
        %s240 = scalar_lea.vmem [#allocation2], %s239
        %p241 = pneg %p44
        %p242 = pneg %p41
        %s243 = sand.u32 %s23, 1
        %s244 = scalar_lea.sflag [#allocation6], %s243
        %s245 = sand.u32 %s57, 1
        %s246 = smul.addr %s245, 256
        %s247 = scalar_lea.vmem [#allocation5], %s246
        %p248 = pneg %p70
        %p249 = pneg %p67
        %s250 = sand.u32 %s23, 1
        %s251 = scalar_lea.sflag [#allocation6], %s250
        %s252 = sand.u32 %s83, 1
        %s253 = smul.addr %s252, 8
        %s254 = scalar_lea.vmem [#allocation7], %s253
        %p255 = pneg %p96
        %p256 = pneg %p93
        %p257 = pneg %p122
        %p258 = pneg %p119
        %s259 = sand.u32 %s109, 1
        %s260 = scalar_lea.sflag [#allocation4], %s259
        %s261 = sand.u32 %s109, 1
        %s262 = smul.addr %s261, 16
        %s263 = scalar_lea.vmem [#allocation8], %s262
        %s264 = smul.u32 2, %s23
        %s265 = smul.u32 2, %s23
        %s266 = smul.u32 2, %s23
        %s267 = smul.u32 2, %s23
        %v268 = vld [vmem:[%s213] ss:$8 sm:$0x3]
        %s269 = scalar_lea.vmem %s213, 64 [#allocation2]
        %v270 = vld [vmem:[%s269] ss:$8 sm:$0x3]
        %v271 = vld [vmem:[%s222] sm:$0xff]
        %v274 = vlaneseq
        %v275 = vshrl.u32 %v274, 7
        %v276 = vsub.s32 0, %v275
        %v277 = vrot.slane %v268, %v276
        %v278 = vlaneseq
        %v279 = vshrl.u32 %v278, 7
        %v280 = vsub.s32 1, %v279
        %v281 = vrot.slane %v268, %v280
        %v282 = vlaneseq
        %v283 = vshrl.u32 %v282, 7
        %v284 = vsub.s32 0, %v283
        %v285 = vrot.slane %v270, %v284
        %v286 = vlaneseq
        %v287 = vshrl.u32 %v286, 7
        %v288 = vsub.s32 1, %v287
        %v289 = vrot.slane %v270, %v288
        %v295 = vcombine.high %v271, %v271
        %v297 = vmul.f32 %v277, %v271
        %v298 = vmul.f32 %v281, %v295
        %v299 = vmul.f32 %v285, %v271
        %v300 = vmul.f32 %v289, %v295
        %v301 = vadd.f32 %v297, 0.0
        %v302 = vadd.f32 %v298, 0.0
        %v303 = vadd.f32 %v299, 0.0
        %v304 = vadd.f32 %v300, 0.0
        %s305 = scalar_lea.vmem %s213, 1 [#allocation2]
        %v306 = vld [vmem:[%s305] ss:$8 sm:$0x3]
        %s307 = scalar_lea.vmem %s213, 65 [#allocation2]
        %v308 = vld [vmem:[%s307] ss:$8 sm:$0x3]
        %s309 = scalar_lea.vmem %s222, 8 [#allocation5]
        %v310 = vld [vmem:[%s309] sm:$0xff]
        %v313 = vlaneseq
        %v314 = vshrl.u32 %v313, 7
        %v315 = vsub.s32 0, %v314
        %v316 = vrot.slane %v306, %v315
        %v317 = vlaneseq
        %v318 = vshrl.u32 %v317, 7
        %v319 = vsub.s32 1, %v318
        %v320 = vrot.slane %v306, %v319
        %v321 = vlaneseq
        %v322 = vshrl.u32 %v321, 7
        %v323 = vsub.s32 0, %v322
        %v324 = vrot.slane %v308, %v323
        %v325 = vlaneseq
        %v326 = vshrl.u32 %v325, 7
        %v327 = vsub.s32 1, %v326
        %v328 = vrot.slane %v308, %v327
        %v334 = vcombine.high %v310, %v310
        %v336 = vmul.f32 %v316, %v310
        %v337 = vmul.f32 %v320, %v334
        %v338 = vmul.f32 %v324, %v310
        %v339 = vmul.f32 %v328, %v334
        %v340 = vadd.f32 %v301, %v336
        %v341 = vadd.f32 %v302, %v337
        %v342 = vadd.f32 %v303, %v338
        %v343 = vadd.f32 %v304, %v339
        %s344 = scalar_lea.vmem %s213, 2 [#allocation2]
        %v345 = vld [vmem:[%s344] ss:$8 sm:$0x3]
        %s346 = scalar_lea.vmem %s213, 66 [#allocation2]
        %v347 = vld [vmem:[%s346] ss:$8 sm:$0x3]
        %s348 = scalar_lea.vmem %s222, 16 [#allocation5]
        %v349 = vld [vmem:[%s348] sm:$0xff]
        %v352 = vlaneseq
        %v353 = vshrl.u32 %v352, 7
        %v354 = vsub.s32 0, %v353
        %v355 = vrot.slane %v345, %v354
        %v356 = vlaneseq
        %v357 = vshrl.u32 %v356, 7
        %v358 = vsub.s32 1, %v357
        %v359 = vrot.slane %v345, %v358
        %v360 = vlaneseq
        %v361 = vshrl.u32 %v360, 7
        %v362 = vsub.s32 0, %v361
        %v363 = vrot.slane %v347, %v362
        %v364 = vlaneseq
        %v365 = vshrl.u32 %v364, 7
        %v366 = vsub.s32 1, %v365
        %v367 = vrot.slane %v347, %v366
        %v373 = vcombine.high %v349, %v349
        %v375 = vmul.f32 %v355, %v349
        %v376 = vmul.f32 %v359, %v373
        %v377 = vmul.f32 %v363, %v349
        %v378 = vmul.f32 %v367, %v373
        %v379 = vadd.f32 %v340, %v375
        %v380 = vadd.f32 %v341, %v376
        %v381 = vadd.f32 %v342, %v377
        %v382 = vadd.f32 %v343, %v378
        %s383 = scalar_lea.vmem %s213, 3 [#allocation2]
        %v384 = vld [vmem:[%s383] ss:$8 sm:$0x3]
        %s385 = scalar_lea.vmem %s213, 67 [#allocation2]
        %v386 = vld [vmem:[%s385] ss:$8 sm:$0x3]
        %s387 = scalar_lea.vmem %s222, 24 [#allocation5]
        %v388 = vld [vmem:[%s387] sm:$0xff]
        %v391 = vlaneseq
        %v392 = vshrl.u32 %v391, 7
        %v393 = vsub.s32 0, %v392
        %v394 = vrot.slane %v384, %v393
        %v395 = vlaneseq
        %v396 = vshrl.u32 %v395, 7
        %v397 = vsub.s32 1, %v396
        %v398 = vrot.slane %v384, %v397
        %v399 = vlaneseq
        %v400 = vshrl.u32 %v399, 7
        %v401 = vsub.s32 0, %v400
        %v402 = vrot.slane %v386, %v401
        %v403 = vlaneseq
        %v404 = vshrl.u32 %v403, 7
        %v405 = vsub.s32 1, %v404
        %v406 = vrot.slane %v386, %v405
        %v412 = vcombine.high %v388, %v388
        %v414 = vmul.f32 %v394, %v388
        %v415 = vmul.f32 %v398, %v412
        %v416 = vmul.f32 %v402, %v388
        %v417 = vmul.f32 %v406, %v412
        %v418 = vadd.f32 %v379, %v414
        %v419 = vadd.f32 %v380, %v415
        %v420 = vadd.f32 %v381, %v416
        %v421 = vadd.f32 %v382, %v417
        %s422 = scalar_lea.vmem %s213, 4 [#allocation2]
        %v423 = vld [vmem:[%s422] ss:$8 sm:$0x3]
        %s424 = scalar_lea.vmem %s213, 68 [#allocation2]
        %v425 = vld [vmem:[%s424] ss:$8 sm:$0x3]
        %s426 = scalar_lea.vmem %s222, 32 [#allocation5]
        %v427 = vld [vmem:[%s426] sm:$0xff]
        %v430 = vlaneseq
        %v431 = vshrl.u32 %v430, 7
        %v432 = vsub.s32 0, %v431
        %v433 = vrot.slane %v423, %v432
        %v434 = vlaneseq
        %v435 = vshrl.u32 %v434, 7
        %v436 = vsub.s32 1, %v435
        %v437 = vrot.slane %v423, %v436
        %v438 = vlaneseq
        %v439 = vshrl.u32 %v438, 7
        %v440 = vsub.s32 0, %v439
        %v441 = vrot.slane %v425, %v440
        %v442 = vlaneseq
        %v443 = vshrl.u32 %v442, 7
        %v444 = vsub.s32 1, %v443
        %v445 = vrot.slane %v425, %v444
        %v451 = vcombine.high %v427, %v427
        %v453 = vmul.f32 %v433, %v427
        %v454 = vmul.f32 %v437, %v451
        %v455 = vmul.f32 %v441, %v427
        %v456 = vmul.f32 %v445, %v451
        %v457 = vadd.f32 %v418, %v453
        %v458 = vadd.f32 %v419, %v454
        %v459 = vadd.f32 %v420, %v455
        %v460 = vadd.f32 %v421, %v456
        %s461 = scalar_lea.vmem %s213, 5 [#allocation2]
        %v462 = vld [vmem:[%s461] ss:$8 sm:$0x3]
        %s463 = scalar_lea.vmem %s213, 69 [#allocation2]
        %v464 = vld [vmem:[%s463] ss:$8 sm:$0x3]
        %s465 = scalar_lea.vmem %s222, 40 [#allocation5]
        %v466 = vld [vmem:[%s465] sm:$0xff]
        %v469 = vlaneseq
        %v470 = vshrl.u32 %v469, 7
        %v471 = vsub.s32 0, %v470
        %v472 = vrot.slane %v462, %v471
        %v473 = vlaneseq
        %v474 = vshrl.u32 %v473, 7
        %v475 = vsub.s32 1, %v474
        %v476 = vrot.slane %v462, %v475
        %v477 = vlaneseq
        %v478 = vshrl.u32 %v477, 7
        %v479 = vsub.s32 0, %v478
        %v480 = vrot.slane %v464, %v479
        %v481 = vlaneseq
        %v482 = vshrl.u32 %v481, 7
        %v483 = vsub.s32 1, %v482
        %v484 = vrot.slane %v464, %v483
        %v490 = vcombine.high %v466, %v466
        %v492 = vmul.f32 %v472, %v466
        %v493 = vmul.f32 %v476, %v490
        %v494 = vmul.f32 %v480, %v466
        %v495 = vmul.f32 %v484, %v490
        %v496 = vadd.f32 %v457, %v492
        %v497 = vadd.f32 %v458, %v493
        %v498 = vadd.f32 %v459, %v494
        %v499 = vadd.f32 %v460, %v495
        %s500 = scalar_lea.vmem %s213, 6 [#allocation2]
        %v501 = vld [vmem:[%s500] ss:$8 sm:$0x3]
        %s502 = scalar_lea.vmem %s213, 70 [#allocation2]
        %v503 = vld [vmem:[%s502] ss:$8 sm:$0x3]
        %s504 = scalar_lea.vmem %s222, 48 [#allocation5]
        %v505 = vld [vmem:[%s504] sm:$0xff]
        %v508 = vlaneseq
        %v509 = vshrl.u32 %v508, 7
        %v510 = vsub.s32 0, %v509
        %v511 = vrot.slane %v501, %v510
        %v512 = vlaneseq
        %v513 = vshrl.u32 %v512, 7
        %v514 = vsub.s32 1, %v513
        %v515 = vrot.slane %v501, %v514
        %v516 = vlaneseq
        %v517 = vshrl.u32 %v516, 7
        %v518 = vsub.s32 0, %v517
        %v519 = vrot.slane %v503, %v518
        %v520 = vlaneseq
        %v521 = vshrl.u32 %v520, 7
        %v522 = vsub.s32 1, %v521
        %v523 = vrot.slane %v503, %v522
        %v529 = vcombine.high %v505, %v505
        %v531 = vmul.f32 %v511, %v505
        %v532 = vmul.f32 %v515, %v529
        %v533 = vmul.f32 %v519, %v505
        %v534 = vmul.f32 %v523, %v529
        %v535 = vadd.f32 %v496, %v531
        %v536 = vadd.f32 %v497, %v532
        %v537 = vadd.f32 %v498, %v533
        %v538 = vadd.f32 %v499, %v534
        %s539 = scalar_lea.vmem %s213, 7 [#allocation2]
        %v540 = vld [vmem:[%s539] ss:$8 sm:$0x3]
        %s541 = scalar_lea.vmem %s213, 71 [#allocation2]
        %v542 = vld [vmem:[%s541] ss:$8 sm:$0x3]
        %s543 = scalar_lea.vmem %s222, 56 [#allocation5]
        %v544 = vld [vmem:[%s543] sm:$0xff]
        %v547 = vlaneseq
        %v548 = vshrl.u32 %v547, 7
        %v549 = vsub.s32 0, %v548
        %v550 = vrot.slane %v540, %v549
        %v551 = vlaneseq
        %v552 = vshrl.u32 %v551, 7
        %v553 = vsub.s32 1, %v552
        %v554 = vrot.slane %v540, %v553
        %v555 = vlaneseq
        %v556 = vshrl.u32 %v555, 7
        %v557 = vsub.s32 0, %v556
        %v558 = vrot.slane %v542, %v557
        %v559 = vlaneseq
        %v560 = vshrl.u32 %v559, 7
        %v561 = vsub.s32 1, %v560
        %v562 = vrot.slane %v542, %v561
        %v568 = vcombine.high %v544, %v544
        %v570 = vmul.f32 %v550, %v544
        %v571 = vmul.f32 %v554, %v568
        %v572 = vmul.f32 %v558, %v544
        %v573 = vmul.f32 %v562, %v568
        %v574 = vadd.f32 %v535, %v570
        %v575 = vadd.f32 %v536, %v571
        %v576 = vadd.f32 %v537, %v572
        %v577 = vadd.f32 %v538, %v573
        %s578 = scalar_lea.vmem %s213, 16 [#allocation2]
        %v579 = vld [vmem:[%s578] ss:$8 sm:$0x3]
        %s580 = scalar_lea.vmem %s213, 80 [#allocation2]
        %v581 = vld [vmem:[%s580] ss:$8 sm:$0x3]
        %s582 = scalar_lea.vmem %s222, 64 [#allocation5]
        %v583 = vld [vmem:[%s582] sm:$0xff]
        %v586 = vlaneseq
        %v587 = vshrl.u32 %v586, 7
        %v588 = vsub.s32 0, %v587
        %v589 = vrot.slane %v579, %v588
        %v590 = vlaneseq
        %v591 = vshrl.u32 %v590, 7
        %v592 = vsub.s32 1, %v591
        %v593 = vrot.slane %v579, %v592
        %v594 = vlaneseq
        %v595 = vshrl.u32 %v594, 7
        %v596 = vsub.s32 0, %v595
        %v597 = vrot.slane %v581, %v596
        %v598 = vlaneseq
        %v599 = vshrl.u32 %v598, 7
        %v600 = vsub.s32 1, %v599
        %v601 = vrot.slane %v581, %v600
        %v607 = vcombine.high %v583, %v583
        %v609 = vmul.f32 %v589, %v583
        %v610 = vmul.f32 %v593, %v607
        %v611 = vmul.f32 %v597, %v583
        %v612 = vmul.f32 %v601, %v607
        %v613 = vadd.f32 %v574, %v609
        %v614 = vadd.f32 %v575, %v610
        %v615 = vadd.f32 %v576, %v611
        %v616 = vadd.f32 %v577, %v612
        %s617 = scalar_lea.vmem %s213, 17 [#allocation2]
        %v618 = vld [vmem:[%s617] ss:$8 sm:$0x3]
        %s619 = scalar_lea.vmem %s213, 81 [#allocation2]
        %v620 = vld [vmem:[%s619] ss:$8 sm:$0x3]
        %s621 = scalar_lea.vmem %s222, 72 [#allocation5]
        %v622 = vld [vmem:[%s621] sm:$0xff]
        %v625 = vlaneseq
        %v626 = vshrl.u32 %v625, 7
        %v627 = vsub.s32 0, %v626
        %v628 = vrot.slane %v618, %v627
        %v629 = vlaneseq
        %v630 = vshrl.u32 %v629, 7
        %v631 = vsub.s32 1, %v630
        %v632 = vrot.slane %v618, %v631
        %v633 = vlaneseq
        %v634 = vshrl.u32 %v633, 7
        %v635 = vsub.s32 0, %v634
        %v636 = vrot.slane %v620, %v635
        %v637 = vlaneseq
        %v638 = vshrl.u32 %v637, 7
        %v639 = vsub.s32 1, %v638
        %v640 = vrot.slane %v620, %v639
        %v646 = vcombine.high %v622, %v622
        %v648 = vmul.f32 %v628, %v622
        %v649 = vmul.f32 %v632, %v646
        %v650 = vmul.f32 %v636, %v622
        %v651 = vmul.f32 %v640, %v646
        %v652 = vadd.f32 %v613, %v648
        %v653 = vadd.f32 %v614, %v649
        %v654 = vadd.f32 %v615, %v650
        %v655 = vadd.f32 %v616, %v651
        %s656 = scalar_lea.vmem %s213, 18 [#allocation2]
        %v657 = vld [vmem:[%s656] ss:$8 sm:$0x3]
        %s658 = scalar_lea.vmem %s213, 82 [#allocation2]
        %v659 = vld [vmem:[%s658] ss:$8 sm:$0x3]
        %s660 = scalar_lea.vmem %s222, 80 [#allocation5]
        %v661 = vld [vmem:[%s660] sm:$0xff]
        %v664 = vlaneseq
        %v665 = vshrl.u32 %v664, 7
        %v666 = vsub.s32 0, %v665
        %v667 = vrot.slane %v657, %v666
        %v668 = vlaneseq
        %v669 = vshrl.u32 %v668, 7
        %v670 = vsub.s32 1, %v669
        %v671 = vrot.slane %v657, %v670
        %v672 = vlaneseq
        %v673 = vshrl.u32 %v672, 7
        %v674 = vsub.s32 0, %v673
        %v675 = vrot.slane %v659, %v674
        %v676 = vlaneseq
        %v677 = vshrl.u32 %v676, 7
        %v678 = vsub.s32 1, %v677
        %v679 = vrot.slane %v659, %v678
        %v685 = vcombine.high %v661, %v661
        %v687 = vmul.f32 %v667, %v661
        %v688 = vmul.f32 %v671, %v685
        %v689 = vmul.f32 %v675, %v661
        %v690 = vmul.f32 %v679, %v685
        %v691 = vadd.f32 %v652, %v687
        %v692 = vadd.f32 %v653, %v688
        %v693 = vadd.f32 %v654, %v689
        %v694 = vadd.f32 %v655, %v690
        %s695 = scalar_lea.vmem %s213, 19 [#allocation2]
        %v696 = vld [vmem:[%s695] ss:$8 sm:$0x3]
        %s697 = scalar_lea.vmem %s213, 83 [#allocation2]
        %v698 = vld [vmem:[%s697] ss:$8 sm:$0x3]
        %s699 = scalar_lea.vmem %s222, 88 [#allocation5]
        %v700 = vld [vmem:[%s699] sm:$0xff]
        %v703 = vlaneseq
        %v704 = vshrl.u32 %v703, 7
        %v705 = vsub.s32 0, %v704
        %v706 = vrot.slane %v696, %v705
        %v707 = vlaneseq
        %v708 = vshrl.u32 %v707, 7
        %v709 = vsub.s32 1, %v708
        %v710 = vrot.slane %v696, %v709
        %v711 = vlaneseq
        %v712 = vshrl.u32 %v711, 7
        %v713 = vsub.s32 0, %v712
        %v714 = vrot.slane %v698, %v713
        %v715 = vlaneseq
        %v716 = vshrl.u32 %v715, 7
        %v717 = vsub.s32 1, %v716
        %v718 = vrot.slane %v698, %v717
        %v724 = vcombine.high %v700, %v700
        %v726 = vmul.f32 %v706, %v700
        %v727 = vmul.f32 %v710, %v724
        %v728 = vmul.f32 %v714, %v700
        %v729 = vmul.f32 %v718, %v724
        %v730 = vadd.f32 %v691, %v726
        %v731 = vadd.f32 %v692, %v727
        %v732 = vadd.f32 %v693, %v728
        %v733 = vadd.f32 %v694, %v729
        %s734 = scalar_lea.vmem %s213, 20 [#allocation2]
        %v735 = vld [vmem:[%s734] ss:$8 sm:$0x3]
        %s736 = scalar_lea.vmem %s213, 84 [#allocation2]
        %v737 = vld [vmem:[%s736] ss:$8 sm:$0x3]
        %s738 = scalar_lea.vmem %s222, 96 [#allocation5]
        %v739 = vld [vmem:[%s738] sm:$0xff]
        %v742 = vlaneseq
        %v743 = vshrl.u32 %v742, 7
        %v744 = vsub.s32 0, %v743
        %v745 = vrot.slane %v735, %v744
        %v746 = vlaneseq
        %v747 = vshrl.u32 %v746, 7
        %v748 = vsub.s32 1, %v747
        %v749 = vrot.slane %v735, %v748
        %v750 = vlaneseq
        %v751 = vshrl.u32 %v750, 7
        %v752 = vsub.s32 0, %v751
        %v753 = vrot.slane %v737, %v752
        %v754 = vlaneseq
        %v755 = vshrl.u32 %v754, 7
        %v756 = vsub.s32 1, %v755
        %v757 = vrot.slane %v737, %v756
        %v763 = vcombine.high %v739, %v739
        %v765 = vmul.f32 %v745, %v739
        %v766 = vmul.f32 %v749, %v763
        %v767 = vmul.f32 %v753, %v739
        %v768 = vmul.f32 %v757, %v763
        %v769 = vadd.f32 %v730, %v765
        %v770 = vadd.f32 %v731, %v766
        %v771 = vadd.f32 %v732, %v767
        %v772 = vadd.f32 %v733, %v768
        %s773 = scalar_lea.vmem %s213, 21 [#allocation2]
        %v774 = vld [vmem:[%s773] ss:$8 sm:$0x3]
        %s775 = scalar_lea.vmem %s213, 85 [#allocation2]
        %v776 = vld [vmem:[%s775] ss:$8 sm:$0x3]
        %s777 = scalar_lea.vmem %s222, 104 [#allocation5]
        %v778 = vld [vmem:[%s777] sm:$0xff]
        %v781 = vlaneseq
        %v782 = vshrl.u32 %v781, 7
        %v783 = vsub.s32 0, %v782
        %v784 = vrot.slane %v774, %v783
        %v785 = vlaneseq
        %v786 = vshrl.u32 %v785, 7
        %v787 = vsub.s32 1, %v786
        %v788 = vrot.slane %v774, %v787
        %v789 = vlaneseq
        %v790 = vshrl.u32 %v789, 7
        %v791 = vsub.s32 0, %v790
        %v792 = vrot.slane %v776, %v791
        %v793 = vlaneseq
        %v794 = vshrl.u32 %v793, 7
        %v795 = vsub.s32 1, %v794
        %v796 = vrot.slane %v776, %v795
        %v802 = vcombine.high %v778, %v778
        %v804 = vmul.f32 %v784, %v778
        %v805 = vmul.f32 %v788, %v802
        %v806 = vmul.f32 %v792, %v778
        %v807 = vmul.f32 %v796, %v802
        %v808 = vadd.f32 %v769, %v804
        %v809 = vadd.f32 %v770, %v805
        %v810 = vadd.f32 %v771, %v806
        %v811 = vadd.f32 %v772, %v807
        %s812 = scalar_lea.vmem %s213, 22 [#allocation2]
        %v813 = vld [vmem:[%s812] ss:$8 sm:$0x3]
        %s814 = scalar_lea.vmem %s213, 86 [#allocation2]
        %v815 = vld [vmem:[%s814] ss:$8 sm:$0x3]
        %s816 = scalar_lea.vmem %s222, 112 [#allocation5]
        %v817 = vld [vmem:[%s816] sm:$0xff]
        %v820 = vlaneseq
        %v821 = vshrl.u32 %v820, 7
        %v822 = vsub.s32 0, %v821
        %v823 = vrot.slane %v813, %v822
        %v824 = vlaneseq
        %v825 = vshrl.u32 %v824, 7
        %v826 = vsub.s32 1, %v825
        %v827 = vrot.slane %v813, %v826
        %v828 = vlaneseq
        %v829 = vshrl.u32 %v828, 7
        %v830 = vsub.s32 0, %v829
        %v831 = vrot.slane %v815, %v830
        %v832 = vlaneseq
        %v833 = vshrl.u32 %v832, 7
        %v834 = vsub.s32 1, %v833
        %v835 = vrot.slane %v815, %v834
        %v841 = vcombine.high %v817, %v817
        %v843 = vmul.f32 %v823, %v817
        %v844 = vmul.f32 %v827, %v841
        %v845 = vmul.f32 %v831, %v817
        %v846 = vmul.f32 %v835, %v841
        %v847 = vadd.f32 %v808, %v843
        %v848 = vadd.f32 %v809, %v844
        %v849 = vadd.f32 %v810, %v845
        %v850 = vadd.f32 %v811, %v846
        %s851 = scalar_lea.vmem %s213, 23 [#allocation2]
        %v852 = vld [vmem:[%s851] ss:$8 sm:$0x3]
        %s853 = scalar_lea.vmem %s213, 87 [#allocation2]
        %v854 = vld [vmem:[%s853] ss:$8 sm:$0x3]
        %s855 = scalar_lea.vmem %s222, 120 [#allocation5]
        %v856 = vld [vmem:[%s855] sm:$0xff]
        %v859 = vlaneseq
        %v860 = vshrl.u32 %v859, 7
        %v861 = vsub.s32 0, %v860
        %v862 = vrot.slane %v852, %v861
        %v863 = vlaneseq
        %v864 = vshrl.u32 %v863, 7
        %v865 = vsub.s32 1, %v864
        %v866 = vrot.slane %v852, %v865
        %v867 = vlaneseq
        %v868 = vshrl.u32 %v867, 7
        %v869 = vsub.s32 0, %v868
        %v870 = vrot.slane %v854, %v869
        %v871 = vlaneseq
        %v872 = vshrl.u32 %v871, 7
        %v873 = vsub.s32 1, %v872
        %v874 = vrot.slane %v854, %v873
        %v880 = vcombine.high %v856, %v856
        %v882 = vmul.f32 %v862, %v856
        %v883 = vmul.f32 %v866, %v880
        %v884 = vmul.f32 %v870, %v856
        %v885 = vmul.f32 %v874, %v880
        %v886 = vadd.f32 %v847, %v882
        %v887 = vadd.f32 %v848, %v883
        %v888 = vadd.f32 %v849, %v884
        %v889 = vadd.f32 %v850, %v885
        %s890 = scalar_lea.vmem %s213, 32 [#allocation2]
        %v891 = vld [vmem:[%s890] ss:$8 sm:$0x3]
        %s892 = scalar_lea.vmem %s213, 96 [#allocation2]
        %v893 = vld [vmem:[%s892] ss:$8 sm:$0x3]
        %s894 = scalar_lea.vmem %s222, 128 [#allocation5]
        %v895 = vld [vmem:[%s894] sm:$0xff]
        %v898 = vlaneseq
        %v899 = vshrl.u32 %v898, 7
        %v900 = vsub.s32 0, %v899
        %v901 = vrot.slane %v891, %v900
        %v902 = vlaneseq
        %v903 = vshrl.u32 %v902, 7
        %v904 = vsub.s32 1, %v903
        %v905 = vrot.slane %v891, %v904
        %v906 = vlaneseq
        %v907 = vshrl.u32 %v906, 7
        %v908 = vsub.s32 0, %v907
        %v909 = vrot.slane %v893, %v908
        %v910 = vlaneseq
        %v911 = vshrl.u32 %v910, 7
        %v912 = vsub.s32 1, %v911
        %v913 = vrot.slane %v893, %v912
        %v919 = vcombine.high %v895, %v895
        %v921 = vmul.f32 %v901, %v895
        %v922 = vmul.f32 %v905, %v919
        %v923 = vmul.f32 %v909, %v895
        %v924 = vmul.f32 %v913, %v919
        %v925 = vadd.f32 %v886, %v921
        %v926 = vadd.f32 %v887, %v922
        %v927 = vadd.f32 %v888, %v923
        %v928 = vadd.f32 %v889, %v924
        %s929 = scalar_lea.vmem %s213, 33 [#allocation2]
        %v930 = vld [vmem:[%s929] ss:$8 sm:$0x3]
        %s931 = scalar_lea.vmem %s213, 97 [#allocation2]
        %v932 = vld [vmem:[%s931] ss:$8 sm:$0x3]
        %s933 = scalar_lea.vmem %s222, 136 [#allocation5]
        %v934 = vld [vmem:[%s933] sm:$0xff]
        %v937 = vlaneseq
        %v938 = vshrl.u32 %v937, 7
        %v939 = vsub.s32 0, %v938
        %v940 = vrot.slane %v930, %v939
        %v941 = vlaneseq
        %v942 = vshrl.u32 %v941, 7
        %v943 = vsub.s32 1, %v942
        %v944 = vrot.slane %v930, %v943
        %v945 = vlaneseq
        %v946 = vshrl.u32 %v945, 7
        %v947 = vsub.s32 0, %v946
        %v948 = vrot.slane %v932, %v947
        %v949 = vlaneseq
        %v950 = vshrl.u32 %v949, 7
        %v951 = vsub.s32 1, %v950
        %v952 = vrot.slane %v932, %v951
        %v958 = vcombine.high %v934, %v934
        %v960 = vmul.f32 %v940, %v934
        %v961 = vmul.f32 %v944, %v958
        %v962 = vmul.f32 %v948, %v934
        %v963 = vmul.f32 %v952, %v958
        %v964 = vadd.f32 %v925, %v960
        %v965 = vadd.f32 %v926, %v961
        %v966 = vadd.f32 %v927, %v962
        %v967 = vadd.f32 %v928, %v963
        %s968 = scalar_lea.vmem %s213, 34 [#allocation2]
        %v969 = vld [vmem:[%s968] ss:$8 sm:$0x3]
        %s970 = scalar_lea.vmem %s213, 98 [#allocation2]
        %v971 = vld [vmem:[%s970] ss:$8 sm:$0x3]
        %s972 = scalar_lea.vmem %s222, 144 [#allocation5]
        %v973 = vld [vmem:[%s972] sm:$0xff]
        %v976 = vlaneseq
        %v977 = vshrl.u32 %v976, 7
        %v978 = vsub.s32 0, %v977
        %v979 = vrot.slane %v969, %v978
        %v980 = vlaneseq
        %v981 = vshrl.u32 %v980, 7
        %v982 = vsub.s32 1, %v981
        %v983 = vrot.slane %v969, %v982
        %v984 = vlaneseq
        %v985 = vshrl.u32 %v984, 7
        %v986 = vsub.s32 0, %v985
        %v987 = vrot.slane %v971, %v986
        %v988 = vlaneseq
        %v989 = vshrl.u32 %v988, 7
        %v990 = vsub.s32 1, %v989
        %v991 = vrot.slane %v971, %v990
        %v997 = vcombine.high %v973, %v973
        %v999 = vmul.f32 %v979, %v973
        %v1000 = vmul.f32 %v983, %v997
        %v1001 = vmul.f32 %v987, %v973
        %v1002 = vmul.f32 %v991, %v997
        %v1003 = vadd.f32 %v964, %v999
        %v1004 = vadd.f32 %v965, %v1000
        %v1005 = vadd.f32 %v966, %v1001
        %v1006 = vadd.f32 %v967, %v1002
        %s1007 = scalar_lea.vmem %s213, 35 [#allocation2]
        %v1008 = vld [vmem:[%s1007] ss:$8 sm:$0x3]
        %s1009 = scalar_lea.vmem %s213, 99 [#allocation2]
        %v1010 = vld [vmem:[%s1009] ss:$8 sm:$0x3]
        %s1011 = scalar_lea.vmem %s222, 152 [#allocation5]
        %v1012 = vld [vmem:[%s1011] sm:$0xff]
        %v1015 = vlaneseq
        %v1016 = vshrl.u32 %v1015, 7
        %v1017 = vsub.s32 0, %v1016
        %v1018 = vrot.slane %v1008, %v1017
        %v1019 = vlaneseq
        %v1020 = vshrl.u32 %v1019, 7
        %v1021 = vsub.s32 1, %v1020
        %v1022 = vrot.slane %v1008, %v1021
        %v1023 = vlaneseq
        %v1024 = vshrl.u32 %v1023, 7
        %v1025 = vsub.s32 0, %v1024
        %v1026 = vrot.slane %v1010, %v1025
        %v1027 = vlaneseq
        %v1028 = vshrl.u32 %v1027, 7
        %v1029 = vsub.s32 1, %v1028
        %v1030 = vrot.slane %v1010, %v1029
        %v1036 = vcombine.high %v1012, %v1012
        %v1038 = vmul.f32 %v1018, %v1012
        %v1039 = vmul.f32 %v1022, %v1036
        %v1040 = vmul.f32 %v1026, %v1012
        %v1041 = vmul.f32 %v1030, %v1036
        %v1042 = vadd.f32 %v1003, %v1038
        %v1043 = vadd.f32 %v1004, %v1039
        %v1044 = vadd.f32 %v1005, %v1040
        %v1045 = vadd.f32 %v1006, %v1041
        %s1046 = scalar_lea.vmem %s213, 36 [#allocation2]
        %v1047 = vld [vmem:[%s1046] ss:$8 sm:$0x3]
        %s1048 = scalar_lea.vmem %s213, 100 [#allocation2]
        %v1049 = vld [vmem:[%s1048] ss:$8 sm:$0x3]
        %s1050 = scalar_lea.vmem %s222, 160 [#allocation5]
        %v1051 = vld [vmem:[%s1050] sm:$0xff]
        %v1054 = vlaneseq
        %v1055 = vshrl.u32 %v1054, 7
        %v1056 = vsub.s32 0, %v1055
        %v1057 = vrot.slane %v1047, %v1056
        %v1058 = vlaneseq
        %v1059 = vshrl.u32 %v1058, 7
        %v1060 = vsub.s32 1, %v1059
        %v1061 = vrot.slane %v1047, %v1060
        %v1062 = vlaneseq
        %v1063 = vshrl.u32 %v1062, 7
        %v1064 = vsub.s32 0, %v1063
        %v1065 = vrot.slane %v1049, %v1064
        %v1066 = vlaneseq
        %v1067 = vshrl.u32 %v1066, 7
        %v1068 = vsub.s32 1, %v1067
        %v1069 = vrot.slane %v1049, %v1068
        %v1075 = vcombine.high %v1051, %v1051
        %v1077 = vmul.f32 %v1057, %v1051
        %v1078 = vmul.f32 %v1061, %v1075
        %v1079 = vmul.f32 %v1065, %v1051
        %v1080 = vmul.f32 %v1069, %v1075
        %v1081 = vadd.f32 %v1042, %v1077
        %v1082 = vadd.f32 %v1043, %v1078
        %v1083 = vadd.f32 %v1044, %v1079
        %v1084 = vadd.f32 %v1045, %v1080
        %s1085 = scalar_lea.vmem %s213, 37 [#allocation2]
        %v1086 = vld [vmem:[%s1085] ss:$8 sm:$0x3]
        %s1087 = scalar_lea.vmem %s213, 101 [#allocation2]
        %v1088 = vld [vmem:[%s1087] ss:$8 sm:$0x3]
        %s1089 = scalar_lea.vmem %s222, 168 [#allocation5]
        %v1090 = vld [vmem:[%s1089] sm:$0xff]
        %v1093 = vlaneseq
        %v1094 = vshrl.u32 %v1093, 7
        %v1095 = vsub.s32 0, %v1094
        %v1096 = vrot.slane %v1086, %v1095
        %v1097 = vlaneseq
        %v1098 = vshrl.u32 %v1097, 7
        %v1099 = vsub.s32 1, %v1098
        %v1100 = vrot.slane %v1086, %v1099
        %v1101 = vlaneseq
        %v1102 = vshrl.u32 %v1101, 7
        %v1103 = vsub.s32 0, %v1102
        %v1104 = vrot.slane %v1088, %v1103
        %v1105 = vlaneseq
        %v1106 = vshrl.u32 %v1105, 7
        %v1107 = vsub.s32 1, %v1106
        %v1108 = vrot.slane %v1088, %v1107
        %v1114 = vcombine.high %v1090, %v1090
        %v1116 = vmul.f32 %v1096, %v1090
        %v1117 = vmul.f32 %v1100, %v1114
        %v1118 = vmul.f32 %v1104, %v1090
        %v1119 = vmul.f32 %v1108, %v1114
        %v1120 = vadd.f32 %v1081, %v1116
        %v1121 = vadd.f32 %v1082, %v1117
        %v1122 = vadd.f32 %v1083, %v1118
        %v1123 = vadd.f32 %v1084, %v1119
        %s1124 = scalar_lea.vmem %s213, 38 [#allocation2]
        %v1125 = vld [vmem:[%s1124] ss:$8 sm:$0x3]
        %s1126 = scalar_lea.vmem %s213, 102 [#allocation2]
        %v1127 = vld [vmem:[%s1126] ss:$8 sm:$0x3]
        %s1128 = scalar_lea.vmem %s222, 176 [#allocation5]
        %v1129 = vld [vmem:[%s1128] sm:$0xff]
        %v1132 = vlaneseq
        %v1133 = vshrl.u32 %v1132, 7
        %v1134 = vsub.s32 0, %v1133
        %v1135 = vrot.slane %v1125, %v1134
        %v1136 = vlaneseq
        %v1137 = vshrl.u32 %v1136, 7
        %v1138 = vsub.s32 1, %v1137
        %v1139 = vrot.slane %v1125, %v1138
        %v1140 = vlaneseq
        %v1141 = vshrl.u32 %v1140, 7
        %v1142 = vsub.s32 0, %v1141
        %v1143 = vrot.slane %v1127, %v1142
        %v1144 = vlaneseq
        %v1145 = vshrl.u32 %v1144, 7
        %v1146 = vsub.s32 1, %v1145
        %v1147 = vrot.slane %v1127, %v1146
        %v1153 = vcombine.high %v1129, %v1129
        %v1155 = vmul.f32 %v1135, %v1129
        %v1156 = vmul.f32 %v1139, %v1153
        %v1157 = vmul.f32 %v1143, %v1129
        %v1158 = vmul.f32 %v1147, %v1153
        %v1159 = vadd.f32 %v1120, %v1155
        %v1160 = vadd.f32 %v1121, %v1156
        %v1161 = vadd.f32 %v1122, %v1157
        %v1162 = vadd.f32 %v1123, %v1158
        %s1163 = scalar_lea.vmem %s213, 39 [#allocation2]
        %v1164 = vld [vmem:[%s1163] ss:$8 sm:$0x3]
        %s1165 = scalar_lea.vmem %s213, 103 [#allocation2]
        %v1166 = vld [vmem:[%s1165] ss:$8 sm:$0x3]
        %s1167 = scalar_lea.vmem %s222, 184 [#allocation5]
        %v1168 = vld [vmem:[%s1167] sm:$0xff]
        %v1171 = vlaneseq
        %v1172 = vshrl.u32 %v1171, 7
        %v1173 = vsub.s32 0, %v1172
        %v1174 = vrot.slane %v1164, %v1173
        %v1175 = vlaneseq
        %v1176 = vshrl.u32 %v1175, 7
        %v1177 = vsub.s32 1, %v1176
        %v1178 = vrot.slane %v1164, %v1177
        %v1179 = vlaneseq
        %v1180 = vshrl.u32 %v1179, 7
        %v1181 = vsub.s32 0, %v1180
        %v1182 = vrot.slane %v1166, %v1181
        %v1183 = vlaneseq
        %v1184 = vshrl.u32 %v1183, 7
        %v1185 = vsub.s32 1, %v1184
        %v1186 = vrot.slane %v1166, %v1185
        %v1192 = vcombine.high %v1168, %v1168
        %v1194 = vmul.f32 %v1174, %v1168
        %v1195 = vmul.f32 %v1178, %v1192
        %v1196 = vmul.f32 %v1182, %v1168
        %v1197 = vmul.f32 %v1186, %v1192
        %v1198 = vadd.f32 %v1159, %v1194
        %v1199 = vadd.f32 %v1160, %v1195
        %v1200 = vadd.f32 %v1161, %v1196
        %v1201 = vadd.f32 %v1162, %v1197
        %s1202 = scalar_lea.vmem %s213, 48 [#allocation2]
        %v1203 = vld [vmem:[%s1202] ss:$8 sm:$0x3]
        %s1204 = scalar_lea.vmem %s213, 112 [#allocation2]
        %v1205 = vld [vmem:[%s1204] ss:$8 sm:$0x3]
        %s1206 = scalar_lea.vmem %s222, 192 [#allocation5]
        %v1207 = vld [vmem:[%s1206] sm:$0xff]
        %v1210 = vlaneseq
        %v1211 = vshrl.u32 %v1210, 7
        %v1212 = vsub.s32 0, %v1211
        %v1213 = vrot.slane %v1203, %v1212
        %v1214 = vlaneseq
        %v1215 = vshrl.u32 %v1214, 7
        %v1216 = vsub.s32 1, %v1215
        %v1217 = vrot.slane %v1203, %v1216
        %v1218 = vlaneseq
        %v1219 = vshrl.u32 %v1218, 7
        %v1220 = vsub.s32 0, %v1219
        %v1221 = vrot.slane %v1205, %v1220
        %v1222 = vlaneseq
        %v1223 = vshrl.u32 %v1222, 7
        %v1224 = vsub.s32 1, %v1223
        %v1225 = vrot.slane %v1205, %v1224
        %v1231 = vcombine.high %v1207, %v1207
        %v1233 = vmul.f32 %v1213, %v1207
        %v1234 = vmul.f32 %v1217, %v1231
        %v1235 = vmul.f32 %v1221, %v1207
        %v1236 = vmul.f32 %v1225, %v1231
        %v1237 = vadd.f32 %v1198, %v1233
        %v1238 = vadd.f32 %v1199, %v1234
        %v1239 = vadd.f32 %v1200, %v1235
        %v1240 = vadd.f32 %v1201, %v1236
        %s1241 = scalar_lea.vmem %s213, 49 [#allocation2]
        %v1242 = vld [vmem:[%s1241] ss:$8 sm:$0x3]
        %s1243 = scalar_lea.vmem %s213, 113 [#allocation2]
        %v1244 = vld [vmem:[%s1243] ss:$8 sm:$0x3]
        %s1245 = scalar_lea.vmem %s222, 200 [#allocation5]
        %v1246 = vld [vmem:[%s1245] sm:$0xff]
        %v1249 = vlaneseq
        %v1250 = vshrl.u32 %v1249, 7
        %v1251 = vsub.s32 0, %v1250
        %v1252 = vrot.slane %v1242, %v1251
        %v1253 = vlaneseq
        %v1254 = vshrl.u32 %v1253, 7
        %v1255 = vsub.s32 1, %v1254
        %v1256 = vrot.slane %v1242, %v1255
        %v1257 = vlaneseq
        %v1258 = vshrl.u32 %v1257, 7
        %v1259 = vsub.s32 0, %v1258
        %v1260 = vrot.slane %v1244, %v1259
        %v1261 = vlaneseq
        %v1262 = vshrl.u32 %v1261, 7
        %v1263 = vsub.s32 1, %v1262
        %v1264 = vrot.slane %v1244, %v1263
        %v1270 = vcombine.high %v1246, %v1246
        %v1272 = vmul.f32 %v1252, %v1246
        %v1273 = vmul.f32 %v1256, %v1270
        %v1274 = vmul.f32 %v1260, %v1246
        %v1275 = vmul.f32 %v1264, %v1270
        %v1276 = vadd.f32 %v1237, %v1272
        %v1277 = vadd.f32 %v1238, %v1273
        %v1278 = vadd.f32 %v1239, %v1274
        %v1279 = vadd.f32 %v1240, %v1275
        %s1280 = scalar_lea.vmem %s213, 50 [#allocation2]
        %v1281 = vld [vmem:[%s1280] ss:$8 sm:$0x3]
        %s1282 = scalar_lea.vmem %s213, 114 [#allocation2]
        %v1283 = vld [vmem:[%s1282] ss:$8 sm:$0x3]
        %s1284 = scalar_lea.vmem %s222, 208 [#allocation5]
        %v1285 = vld [vmem:[%s1284] sm:$0xff]
        %v1288 = vlaneseq
        %v1289 = vshrl.u32 %v1288, 7
        %v1290 = vsub.s32 0, %v1289
        %v1291 = vrot.slane %v1281, %v1290
        %v1292 = vlaneseq
        %v1293 = vshrl.u32 %v1292, 7
        %v1294 = vsub.s32 1, %v1293
        %v1295 = vrot.slane %v1281, %v1294
        %v1296 = vlaneseq
        %v1297 = vshrl.u32 %v1296, 7
        %v1298 = vsub.s32 0, %v1297
        %v1299 = vrot.slane %v1283, %v1298
        %v1300 = vlaneseq
        %v1301 = vshrl.u32 %v1300, 7
        %v1302 = vsub.s32 1, %v1301
        %v1303 = vrot.slane %v1283, %v1302
        %v1309 = vcombine.high %v1285, %v1285
        %v1311 = vmul.f32 %v1291, %v1285
        %v1312 = vmul.f32 %v1295, %v1309
        %v1313 = vmul.f32 %v1299, %v1285
        %v1314 = vmul.f32 %v1303, %v1309
        %v1315 = vadd.f32 %v1276, %v1311
        %v1316 = vadd.f32 %v1277, %v1312
        %v1317 = vadd.f32 %v1278, %v1313
        %v1318 = vadd.f32 %v1279, %v1314
        %s1319 = scalar_lea.vmem %s213, 51 [#allocation2]
        %v1320 = vld [vmem:[%s1319] ss:$8 sm:$0x3]
        %s1321 = scalar_lea.vmem %s213, 115 [#allocation2]
        %v1322 = vld [vmem:[%s1321] ss:$8 sm:$0x3]
        %s1323 = scalar_lea.vmem %s222, 216 [#allocation5]
        %v1324 = vld [vmem:[%s1323] sm:$0xff]
        %v1327 = vlaneseq
        %v1328 = vshrl.u32 %v1327, 7
        %v1329 = vsub.s32 0, %v1328
        %v1330 = vrot.slane %v1320, %v1329
        %v1331 = vlaneseq
        %v1332 = vshrl.u32 %v1331, 7
        %v1333 = vsub.s32 1, %v1332
        %v1334 = vrot.slane %v1320, %v1333
        %v1335 = vlaneseq
        %v1336 = vshrl.u32 %v1335, 7
        %v1337 = vsub.s32 0, %v1336
        %v1338 = vrot.slane %v1322, %v1337
        %v1339 = vlaneseq
        %v1340 = vshrl.u32 %v1339, 7
        %v1341 = vsub.s32 1, %v1340
        %v1342 = vrot.slane %v1322, %v1341
        %v1348 = vcombine.high %v1324, %v1324
        %v1350 = vmul.f32 %v1330, %v1324
        %v1351 = vmul.f32 %v1334, %v1348
        %v1352 = vmul.f32 %v1338, %v1324
        %v1353 = vmul.f32 %v1342, %v1348
        %v1354 = vadd.f32 %v1315, %v1350
        %v1355 = vadd.f32 %v1316, %v1351
        %v1356 = vadd.f32 %v1317, %v1352
        %v1357 = vadd.f32 %v1318, %v1353
        %s1358 = scalar_lea.vmem %s213, 52 [#allocation2]
        %v1359 = vld [vmem:[%s1358] ss:$8 sm:$0x3]
        %s1360 = scalar_lea.vmem %s213, 116 [#allocation2]
        %v1361 = vld [vmem:[%s1360] ss:$8 sm:$0x3]
        %s1362 = scalar_lea.vmem %s222, 224 [#allocation5]
        %v1363 = vld [vmem:[%s1362] sm:$0xff]
        %v1366 = vlaneseq
        %v1367 = vshrl.u32 %v1366, 7
        %v1368 = vsub.s32 0, %v1367
        %v1369 = vrot.slane %v1359, %v1368
        %v1370 = vlaneseq
        %v1371 = vshrl.u32 %v1370, 7
        %v1372 = vsub.s32 1, %v1371
        %v1373 = vrot.slane %v1359, %v1372
        %v1374 = vlaneseq
        %v1375 = vshrl.u32 %v1374, 7
        %v1376 = vsub.s32 0, %v1375
        %v1377 = vrot.slane %v1361, %v1376
        %v1378 = vlaneseq
        %v1379 = vshrl.u32 %v1378, 7
        %v1380 = vsub.s32 1, %v1379
        %v1381 = vrot.slane %v1361, %v1380
        %v1387 = vcombine.high %v1363, %v1363
        %v1389 = vmul.f32 %v1369, %v1363
        %v1390 = vmul.f32 %v1373, %v1387
        %v1391 = vmul.f32 %v1377, %v1363
        %v1392 = vmul.f32 %v1381, %v1387
        %v1393 = vadd.f32 %v1354, %v1389
        %v1394 = vadd.f32 %v1355, %v1390
        %v1395 = vadd.f32 %v1356, %v1391
        %v1396 = vadd.f32 %v1357, %v1392
        %s1397 = scalar_lea.vmem %s213, 53 [#allocation2]
        %v1398 = vld [vmem:[%s1397] ss:$8 sm:$0x3]
        %s1399 = scalar_lea.vmem %s213, 117 [#allocation2]
        %v1400 = vld [vmem:[%s1399] ss:$8 sm:$0x3]
        %s1401 = scalar_lea.vmem %s222, 232 [#allocation5]
        %v1402 = vld [vmem:[%s1401] sm:$0xff]
        %v1405 = vlaneseq
        %v1406 = vshrl.u32 %v1405, 7
        %v1407 = vsub.s32 0, %v1406
        %v1408 = vrot.slane %v1398, %v1407
        %v1409 = vlaneseq
        %v1410 = vshrl.u32 %v1409, 7
        %v1411 = vsub.s32 1, %v1410
        %v1412 = vrot.slane %v1398, %v1411
        %v1413 = vlaneseq
        %v1414 = vshrl.u32 %v1413, 7
        %v1415 = vsub.s32 0, %v1414
        %v1416 = vrot.slane %v1400, %v1415
        %v1417 = vlaneseq
        %v1418 = vshrl.u32 %v1417, 7
        %v1419 = vsub.s32 1, %v1418
        %v1420 = vrot.slane %v1400, %v1419
        %v1426 = vcombine.high %v1402, %v1402
        %v1428 = vmul.f32 %v1408, %v1402
        %v1429 = vmul.f32 %v1412, %v1426
        %v1430 = vmul.f32 %v1416, %v1402
        %v1431 = vmul.f32 %v1420, %v1426
        %v1432 = vadd.f32 %v1393, %v1428
        %v1433 = vadd.f32 %v1394, %v1429
        %v1434 = vadd.f32 %v1395, %v1430
        %v1435 = vadd.f32 %v1396, %v1431
        %s1436 = scalar_lea.vmem %s213, 54 [#allocation2]
        %v1437 = vld [vmem:[%s1436] ss:$8 sm:$0x3]
        %s1438 = scalar_lea.vmem %s213, 118 [#allocation2]
        %v1439 = vld [vmem:[%s1438] ss:$8 sm:$0x3]
        %s1440 = scalar_lea.vmem %s222, 240 [#allocation5]
        %v1441 = vld [vmem:[%s1440] sm:$0xff]
        %v1444 = vlaneseq
        %v1445 = vshrl.u32 %v1444, 7
        %v1446 = vsub.s32 0, %v1445
        %v1447 = vrot.slane %v1437, %v1446
        %v1448 = vlaneseq
        %v1449 = vshrl.u32 %v1448, 7
        %v1450 = vsub.s32 1, %v1449
        %v1451 = vrot.slane %v1437, %v1450
        %v1452 = vlaneseq
        %v1453 = vshrl.u32 %v1452, 7
        %v1454 = vsub.s32 0, %v1453
        %v1455 = vrot.slane %v1439, %v1454
        %v1456 = vlaneseq
        %v1457 = vshrl.u32 %v1456, 7
        %v1458 = vsub.s32 1, %v1457
        %v1459 = vrot.slane %v1439, %v1458
        %v1465 = vcombine.high %v1441, %v1441
        %v1467 = vmul.f32 %v1447, %v1441
        %v1468 = vmul.f32 %v1451, %v1465
        %v1469 = vmul.f32 %v1455, %v1441
        %v1470 = vmul.f32 %v1459, %v1465
        %v1471 = vadd.f32 %v1432, %v1467
        %v1472 = vadd.f32 %v1433, %v1468
        %v1473 = vadd.f32 %v1434, %v1469
        %v1474 = vadd.f32 %v1435, %v1470
        %s1475 = scalar_lea.vmem %s213, 55 [#allocation2]
        %v1476 = vld [vmem:[%s1475] ss:$8 sm:$0x3]
        %s1477 = scalar_lea.vmem %s213, 119 [#allocation2]
        %v1478 = vld [vmem:[%s1477] ss:$8 sm:$0x3]
        %s1479 = scalar_lea.vmem %s222, 248 [#allocation5]
        %v1480 = vld [vmem:[%s1479] sm:$0xff]
        %v1483 = vlaneseq
        %v1484 = vshrl.u32 %v1483, 7
        %v1485 = vsub.s32 0, %v1484
        %v1486 = vrot.slane %v1476, %v1485
        %v1487 = vlaneseq
        %v1488 = vshrl.u32 %v1487, 7
        %v1489 = vsub.s32 1, %v1488
        %v1490 = vrot.slane %v1476, %v1489
        %v1491 = vlaneseq
        %v1492 = vshrl.u32 %v1491, 7
        %v1493 = vsub.s32 0, %v1492
        %v1494 = vrot.slane %v1478, %v1493
        %v1495 = vlaneseq
        %v1496 = vshrl.u32 %v1495, 7
        %v1497 = vsub.s32 1, %v1496
        %v1498 = vrot.slane %v1478, %v1497
        %v1504 = vcombine.high %v1480, %v1480
        %v1506 = vmul.f32 %v1486, %v1480
        %v1507 = vmul.f32 %v1490, %v1504
        %v1508 = vmul.f32 %v1494, %v1480
        %v1509 = vmul.f32 %v1498, %v1504
        %v1510 = vadd.f32 %v1471, %v1506
        %v1511 = vadd.f32 %v1472, %v1507
        %v1512 = vadd.f32 %v1473, %v1508
        %v1513 = vadd.f32 %v1474, %v1509
        %v1514 = vld [vmem:[%s231] sm:$0xff]
        %v1516 = vcombine.high %v1514, %v1514
        %v1518 = vadd.f32 %v1510, %v1514
        %v1519 = vadd.f32 %v1511, %v1516
        %v1520 = vadd.f32 %v1512, %v1514
        %v1521 = vadd.f32 %v1513, %v1516
        %v1526 = vcombine.low %v1518, %v1519
        %v1527 = vcombine.low %v1520, %v1521
        %1530 = vst [vmem:[%s263] sm:$0xff] %v1526
        %1531 = vst [vmem:[%s263 + $0x8] sm:$0xff] %v1527
        %s1532 = sand.u32 %s109, 1
        %s1533 = scalar_lea.sflag [#allocation4], %s1532
        %s1534 = sand.u32 %s109, 1
        %s1535 = smul.addr %s1534, 16
        %s1536 = scalar_lea.vmem [#allocation8], %s1535
        // Predicated region
        $region45: #{tpu_custom_call.1} parent=31 // pred_check
          %p1537 = pneg %p119
        $region46: #{tpu_custom_call.1} parent=31 // pred_check_branch
          %1539 = sbr.rel (%p1537) target = $region48
        $region47: #{tpu_custom_call.1} parent=31 // pred_region
          %s1540 = smul.u32 2, %s23
          %s1542 = ssub.s32 256, 256
          %1543 = vsyncadd %s1533, %s1542
          %s1544 = smul.addr %s1540, 64
          %s1545 = scalar_lea.hbm %s3, %s1544
          %s1546 = sshll.u32 %s1536, 4
          %s1547 = int_to_ptr.vmem [resolvable:$true] %s1546
          %1552 = dma.vmem_to_hbm [thread:$0]  %s1547, 256, %s1545, %s1533, 128, 256, 8
        $region48: #{tpu_custom_call.1} parent=31 // pred_fallthru
          _
      $region32: #{tpu_custom_call.1} parent=5 // pred_fallthru
        _
      %p1553 = scmp.le.s32.totalorder 2, %s18
      // Predicated region
      $region49: #{tpu_custom_call.1} parent=5 // pred_check
        %p1554 = pneg %p1553
      $region50: #{tpu_custom_call.1} parent=5 // pred_check_branch
        %1556 = sbr.rel (%p1554) target = $region52
      $region51: #{tpu_custom_call.1} parent=5 // pred_region
        %s1557 = ssub.s32 %s18, 2
        // Predicated region
        $region53: #{tpu_custom_call.1} parent=51 // pred_check
          %p1558 = pneg %p125
        $region54: #{tpu_custom_call.1} parent=51 // pred_check_branch
          %1560 = sbr.rel (%p1558) target = $region56
        $region55: #{tpu_custom_call.1} parent=51 // pred_region
          %s1561 = sand.u32 %s110, 1
          %s1562 = scalar_lea.sflag [#allocation4], %s1561
          %s1563 = sand.u32 %s110, 1
          %s1564 = smul.addr %s1563, 16
          %s1565 = scalar_lea.vmem [#allocation8], %s1564
          %1566 = dma.done %s1562, 256
        $region56: #{tpu_custom_call.1} parent=51 // pred_fallthru
          _
      $region52: #{tpu_custom_call.1} parent=5 // pred_fallthru
        _
    $region6: #{tpu_custom_call.1} parent=1 // loop_footer
      %s22 = sadd.s32 1, %s18
    $region7: #{tpu_custom_call.1} parent=1 // loop_footer_branch
      %17 = sbr.rel target = $region3
    $region8: #{tpu_custom_call.1} parent=1 // loop_exit
      _
    %1567 = vsyncpa [#allocation3], 1
    %s1568 = scalar_lea.sflag [#allocation3], 1
    %1569 = vsyncpa %s1568, 1
    %1570 = vsyncpa [#allocation6], 1
    %s1571 = scalar_lea.sflag [#allocation6], 1
    %1572 = vsyncpa %s1571, 1
    %1573 = vsyncpa [#allocation4], 1
    %s1574 = scalar_lea.sflag [#allocation4], 1
    %1575 = vsyncpa %s1574, 1

</llo_original>
